<compile_context>
chip_gen: v7x
topology: tpu7x:2x2x1
jax: 0.10.0
libtpu: 0.0.40
codegen_flags: <defaults>
</compile_context>

<pallas_src>
import functools

import jax
import jax.numpy as jnp
from jax.experimental import pallas as pl
from jax.experimental.pallas import tpu as pltpu


# ----------------------------------------------------------------------------
# Small helpers
# ----------------------------------------------------------------------------
def _round_up(x, m):
    return ((x + m - 1) // m) * m


def _pad2d(a, rows, cols):
    return jnp.pad(a, ((0, rows - a.shape[0]), (0, cols - a.shape[1])))


def _vmem_capacity_bytes():
    """Per-core VMEM capacity; fall back to the smallest (v7x, 64 MiB)."""
    try:
        return int(pltpu.get_tpu_info().vmem_capacity_bytes)
    except Exception:
        return 64 * 1024 * 1024


def _vmem_limit_bytes():
    cap = _vmem_capacity_bytes()
    # ~96 MiB on 128 MiB parts (v5e/v6e), ~48 MiB on 64 MiB parts (v7x).
    return max(32 * 1024 * 1024, min((cap * 3) // 4, 112 * 1024 * 1024))


def _pass2_vmem_bytes(tm, tk, n_pad, f_in_pad, f_out_pad, out_bytes, h_resident):
    """Conservative VMEM estimate for pass 2 (double-buffering everywhere)."""
    b = 2 * tm * tk * 2                                                  # A tiles (bf16)
    b += (2 * n_pad * f_out_pad * 2) if h_resident else (2 * tk * f_out_pad * 2)  # H
    b += 2 * tm * f_in_pad * 2                                           # X row tile
    b += 2 * f_in_pad * f_out_pad * 2                                    # W_r
    b += 2 * f_out_pad * 4                                               # bias
    b += 2 * tm * 4                                                      # 1/deg
    b += 2 * tm * f_out_pad * out_bytes                                  # output tile
    b += tm * f_out_pad * 4                                              # f32 accumulator
    return b


def _choose_pass2_config(n, f_in_pad, f_out_pad, out_bytes, budget):
    """Pick (tm, tk, h_resident, n_pad): biggest tiles fitting the VMEM budget,
    preferring a fully VMEM-resident pre-projected H."""
    n128 = _round_up(max(n, 1), 128)
    tm_cands = [t for t in (512, 256, 128) if t <= n128] or [128]
    tk_cands = [t for t in (2048, 1024, 512, 256, 128) if t <= n128] or [128]
    for tm in tm_cands:
        for tk in tk_cands:
            n_pad = _round_up(n128, max(tm, tk))
            for h_res in (True, False):
                if _pass2_vmem_bytes(tm, tk, n_pad, f_in_pad, f_out_pad,
                                     out_bytes, h_res) <= budget:
                    return tm, tk, h_res, n_pad
    return 128, 128, False, _round_up(n128, 128)


# ----------------------------------------------------------------------------
# Pallas kernels
# ----------------------------------------------------------------------------
def _project_kernel(x_ref, wl_ref, h_ref):
    """H = X @ W_l (bf16), per node-row tile (reassociated neighbor projection)."""
    h_ref[...] = jnp.dot(x_ref[...], wl_ref[...],
                         preferred_element_type=jnp.float32).astype(h_ref.dtype)


def _aggregate_kernel(bid_ref, cnt_ref, a_ref, h_ref, x_ref, wr_ref, b_ref,
                      inv_ref, o_ref, acc_ref, *, activation, n_valid_cols,
                      h_resident, tk):
    """out = (A_cnt @ H) * inv_deg + X @ W_r + b  (+ fused activation).

    Grid = (row tiles, neighbor-block slots).  Only nonzero adjacency blocks
    (compacted per row tile in bid/cnt, scalar-prefetched into SMEM) are
    multiplied; zero blocks are skipped and their DMAs elided because the
    block index is held constant for the padded slots.
    """
    i = pl.program_id(0)
    k = pl.program_id(1)

    @pl.when(k == 0)
    def _():
        acc_ref[...] = jnp.zeros_like(acc_ref)

    @pl.when(k < cnt_ref[i])
    def _():
        if h_resident:
            off = pl.multiple_of(bid_ref[i, k] * tk, tk)
            h = h_ref[pl.ds(off, tk), :]
        else:
            h = h_ref[...]
        acc_ref[...] += jnp.dot(a_ref[...], h,
                                preferred_element_type=jnp.float32)

    @pl.when(k == pl.num_programs(1) - 1)
    def _():
        self_term = jnp.dot(x_ref[...], wr_ref[...],
                            preferred_element_type=jnp.float32) + b_ref[...]
        out = acc_ref[...] * inv_ref[...] + self_term
        if activation == "relu":
            out = jnp.maximum(out, 0.0)
        elif activation == "log_softmax":
            # Mask padded class columns so they do not contribute to softmax.
            col = jax.lax.broadcasted_iota(jnp.int32, out.shape, 1)
            out = jnp.where(col < n_valid_cols, out, -jnp.inf)
            m = jnp.max(out, axis=1, keepdims=True)
            shifted = out - m
            lse = jnp.log(jnp.sum(jnp.exp(shifted), axis=1, keepdims=True))
            out = shifted - lse
        # activation == "none": pass through
        o_ref[...] = out.astype(o_ref.dtype)


# ----------------------------------------------------------------------------
# One SAGEConv layer = projection pass + block-sparse aggregation pass
# ----------------------------------------------------------------------------
def sage_conv(bid, cnt, adj_cnt, inv_deg, x, w_l, w_r, b, *, tm, tk, h_resident,
              vmem_limit, activation="none", n_valid_cols=None,
              out_dtype=jnp.float32):
    """bid:     (nR, nK) int32 compacted nonzero column-block ids per row tile
       cnt:     (nR,)    int32 number of nonzero column blocks per row tile
       adj_cnt: (Np, Np) bf16  un-normalized in-edge counts (padded)
       inv_deg: (Np, 1)  f32   1/in-degree (0 for isolated / padded nodes)
       x:       (Np, Fi) bf16  padded node features
       w_l/w_r: (Fi, Fo) bf16  padded weights,  b: (1, Fo) f32 padded bias."""
    n_pad = adj_cnt.shape[0]
    f_in_pad = x.shape[1]
    f_out_pad = w_l.shape[1]
    if n_valid_cols is None:
        n_valid_cols = f_out_pad
    n_row_blocks = n_pad // tm
    n_col_blocks = n_pad // tk

    # ---- pass 1: neighbor projection  H = X @ W_l ----
    h_proj = pl.pallas_call(
        _project_kernel,
        out_shape=jax.ShapeDtypeStruct((n_pad, f_out_pad), jnp.bfloat16),
        grid_spec=pltpu.PrefetchScalarGridSpec(
            num_scalar_prefetch=0,
            grid=(n_row_blocks,),
            in_specs=[
                pl.BlockSpec((tm, f_in_pad), lambda i: (i, 0)),
                pl.BlockSpec((f_in_pad, f_out_pad), lambda i: (0, 0)),
            ],
            out_specs=pl.BlockSpec((tm, f_out_pad), lambda i: (i, 0)),
        ),
        compiler_params=pltpu.CompilerParams(
            dimension_semantics=("parallel",),
            vmem_limit_bytes=vmem_limit,
        ),
    )(x, w_l)

    # ---- pass 2: block-sparse neighbor aggregation + fused self term ----
    if h_resident:
        # H lives fully in VMEM; the kernel slices the needed tk-row window.
        h_spec = pl.BlockSpec((n_pad, f_out_pad), lambda i, k, bs, cs: (0, 0))
    else:
        # Stream only the nonzero H blocks (block id read from SMEM).
        h_spec = pl.BlockSpec((tk, f_out_pad), lambda i, k, bs, cs: (bs[i, k], 0))

    kernel = functools.partial(
        _aggregate_kernel, activation=activation, n_valid_cols=n_valid_cols,
        h_resident=h_resident, tk=tk)

    out = pl.pallas_call(
        kernel,
        out_shape=jax.ShapeDtypeStruct((n_pad, f_out_pad), out_dtype),
        grid_spec=pltpu.PrefetchScalarGridSpec(
            num_scalar_prefetch=2,
            grid=(n_row_blocks, n_col_blocks),
            in_specs=[
                pl.BlockSpec((tm, tk), lambda i, k, bs, cs: (i, bs[i, k])),      # A
                h_spec,                                                          # H
                pl.BlockSpec((tm, f_in_pad), lambda i, k, bs, cs: (i, 0)),       # X rows
                pl.BlockSpec((f_in_pad, f_out_pad), lambda i, k, bs, cs: (0, 0)),# W_r
                pl.BlockSpec((1, f_out_pad), lambda i, k, bs, cs: (0, 0)),       # b
                pl.BlockSpec((tm, 1), lambda i, k, bs, cs: (i, 0)),              # 1/deg
            ],
            out_specs=pl.BlockSpec((tm, f_out_pad), lambda i, k, bs, cs: (i, 0)),
            scratch_shapes=[pltpu.VMEM((tm, f_out_pad), jnp.float32)],
        ),
        compiler_params=pltpu.CompilerParams(
            # TODO(synk): on v7x confirm the row-tile axis splits across both
            # TensorCores; switch to pltpu.CORE_PARALLEL if the 2nd TC idles.
            dimension_semantics=("parallel", "arbitrary"),
            vmem_limit_bytes=vmem_limit,
        ),
    )(bid, cnt, adj_cnt, h_proj, x, w_r, b, inv_deg)
    return out


# ----------------------------------------------------------------------------
# Glue: parameter init, graph tensors, full forward pass
# ----------------------------------------------------------------------------
def init_sage_conv_params(key, f_in, f_out):
    k1, k2 = jax.random.split(key)
    scale = 1.0 / jnp.sqrt(jnp.float32(f_in))
    w_l = jax.random.normal(k1, (f_in, f_out), jnp.float32) * scale
    w_r = jax.random.normal(k2, (f_in, f_out), jnp.float32) * scale
    b_l = jnp.zeros((1, f_out), jnp.float32)
    return {"w_l": w_l, "w_r": w_r, "b_l": b_l}


def init_graphsage_params(key, n_features, n_hidden_units, n_classes,
                          n_hidden_layers=1):
    keys = jax.random.split(key, n_hidden_layers + 1)
    convs = [init_sage_conv_params(keys[0], n_features, n_hidden_units)]
    for i in range(1, n_hidden_layers):
        convs.append(init_sage_conv_params(keys[i], n_hidden_units, n_hidden_units))
    output = init_sage_conv_params(keys[-1], n_hidden_units, n_classes)
    return {"convs": convs, "output": output}


def build_graph_tensors(edge_index, num_nodes, n_pad, tm, tk):
    """Un-normalized bf16 in-edge count adjacency, f32 1/deg, and the per-row-tile
    compacted nonzero (tm, tk) block lists used for the block-sparse skip.

    edge_index: (2, E) int32, row 0 = source, row 1 = target (PyG convention).
    A_cnt[i, j] = multiplicity of edge j -> i.  Note: bf16 counts are exact only
    up to 256 parallel edges per node pair; degrees are accumulated exactly in
    f32 from the edge list.
    """
    src, dst = edge_index[0], edge_index[1]
    # Built directly in bf16 -> no transient (n_pad, n_pad) f32 copy.
    adj = jnp.zeros((n_pad, n_pad), jnp.bfloat16).at[dst, src].add(jnp.bfloat16(1.0))
    deg = jnp.zeros((n_pad, 1), jnp.float32).at[dst, 0].add(1.0)
    inv_deg = jnp.where(deg > 0, 1.0 / deg, 0.0).astype(jnp.float32)

    n_row_blocks, n_col_blocks = n_pad // tm, n_pad // tk
    nz = jnp.any(adj.reshape(n_row_blocks, tm, n_col_blocks, tk) != 0,
                 axis=(1, 3))                                   # (nR, nK) bool
    cnt = jnp.sum(nz, axis=1).astype(jnp.int32)                 # (nR,)
    k_iota = jnp.arange(n_col_blocks, dtype=jnp.int32)[None, :]
    # Unique integer sort keys: nonzero blocks first (ascending), zeros after.
    keys = jnp.where(nz, k_iota, k_iota + n_col_blocks)
    order = jnp.argsort(keys, axis=1).astype(jnp.int32)
    # Pad the ragged tail with the last valid id so the block index does not
    # change on skipped steps -> their DMAs are elided.
    last = jnp.take_along_axis(order, jnp.maximum(cnt - 1, 0)[:, None], axis=1)
    bid = jnp.where(k_iota < cnt[:, None], order, last).astype(jnp.int32)
    return adj, inv_deg, bid, cnt


def _pad_layer(layer):
    w_l, w_r, b = layer["w_l"], layer["w_r"], layer["b_l"]
    f_i, f_o = w_l.shape
    f_i_pad = _round_up(f_i, 128)
    f_o_pad = _round_up(f_o, 128)
    w_l_p = _pad2d(w_l, f_i_pad, f_o_pad).astype(jnp.bfloat16)
    w_r_p = _pad2d(w_r, f_i_pad, f_o_pad).astype(jnp.bfloat16)
    b_p = _pad2d(b, 1, f_o_pad)
    return w_l_p, w_r_p, b_p, f_o


def graphsage_forward(params, x, edge_index, apply_activation=True):
    n, f_in = x.shape

    # Padded feature dims across the whole stack -> one shared tile/VMEM config.
    dims = ([f_in] + [l["w_l"].shape[1] for l in params["convs"]]
            + [params["output"]["w_l"].shape[1]])
    fpad = [_round_up(d, 128) for d in dims]
    max_fin, max_fout = max(fpad[:-1]), max(fpad[1:])

    vmem_limit = _vmem_limit_bytes()
    budget = int(vmem_limit * 0.8)
    tm, tk, h_resident, n_pad = _choose_pass2_config(n, max_fin, max_fout, 4, budget)

    adj_cnt, inv_deg, bid, cnt = build_graph_tensors(edge_index, n, n_pad, tm, tk)

    h = _pad2d(x.astype(jnp.float32), n_pad, fpad[0]).astype(jnp.bfloat16)

    conv_kwargs = dict(tm=tm, tk=tk, h_resident=h_resident, vmem_limit=vmem_limit)
    for layer in params["convs"]:
        w_l_p, w_r_p, b_p, _ = _pad_layer(layer)
        h = sage_conv(bid, cnt, adj_cnt, inv_deg, h, w_l_p, w_r_p, b_p,
                      activation="relu", out_dtype=jnp.bfloat16, **conv_kwargs)

    w_l_p, w_r_p, b_p, n_classes = _pad_layer(params["output"])
    final_act = "log_softmax" if apply_activation else "none"
    out = sage_conv(bid, cnt, adj_cnt, inv_deg, h, w_l_p, w_r_p, b_p,
                    activation=final_act, n_valid_cols=n_classes,
                    out_dtype=jnp.float32, **conv_kwargs)
    return out[:n, :n_classes]


def reference_forward(params, x, edge_index, apply_activation=True):
    """Pure-JAX f32 reference (for correctness checking only)."""
    n = x.shape[0]
    src, dst = edge_index[0], edge_index[1]
    adj = jnp.zeros((n, n), jnp.float32).at[dst, src].add(1.0)
    deg = jnp.sum(adj, axis=1, keepdims=True)
    adj_norm = adj * jnp.where(deg > 0, 1.0 / deg, 0.0)
    h = x
    for layer in params["convs"]:
        h = jax.nn.relu(adj_norm @ h @ layer["w_l"]
                        + h @ layer["w_r"] + layer["b_l"])
    ol = params["output"]
    out = adj_norm @ h @ ol["w_l"] + h @ ol["w_r"] + ol["b_l"]
    return jax.nn.log_softmax(out, axis=1) if apply_activation else out


# ----------------------------------------------------------------------------
# Example run
# ----------------------------------------------------------------------------
if __name__ == "__main__":
    # Small synthetic graph: 16 nodes, 8 input features, 16 hidden units,
    # 4 classes, 1 hidden SAGEConv layer + output SAGEConv layer.
    N_NODES = 16
    N_FEATURES = 8
    N_HIDDEN = 16
    N_CLASSES = 4
    N_HIDDEN_LAYERS = 1

    key = jax.random.PRNGKey(0)
    k_x, k_p = jax.random.split(key, 2)

    x = jax.random.normal(k_x, (N_NODES, N_FEATURES), jnp.float32)

    # Deterministic edge_index (2, E): ring edges both directions + extras
    src_ring = jnp.arange(N_NODES, dtype=jnp.int32)
    dst_ring = (src_ring + 1) % N_NODES
    extra_src = jnp.array([0, 3, 7, 12], dtype=jnp.int32)
    extra_dst = jnp.array([8, 11, 2, 5], dtype=jnp.int32)
    src = jnp.concatenate([src_ring, dst_ring, extra_src])
    dst = jnp.concatenate([dst_ring, src_ring, extra_dst])
    edge_index = jnp.stack([src, dst], axis=0)  # (2, E)

    params = init_graphsage_params(k_p, N_FEATURES, N_HIDDEN, N_CLASSES,
                                   n_hidden_layers=N_HIDDEN_LAYERS)

    fwd = jax.jit(functools.partial(graphsage_forward, apply_activation=True))
    out = fwd(params, x, edge_index)
    out = jax.block_until_ready(out)

    # Sanity: shape + log_softmax rows exponentiate-sum to ~1
    assert out.shape == (N_NODES, N_CLASSES)
    row_sums = jnp.sum(jnp.exp(out), axis=1)
    assert bool(jnp.all(jnp.abs(row_sums - 1.0) < 1e-4))

    # Numerical check vs pure-JAX f32 reference (bf16 MXU inputs -> loose tol)
    ref = reference_forward(params, x, edge_index, apply_activation=True)
    max_diff = float(jnp.max(jnp.abs(out - ref)))
    assert max_diff < 0.15, f"kernel vs reference max abs diff {max_diff}"

    print("KERNEL_OK")
</pallas_src>

<mosaic_0001>
module attributes {stable_mosaic.version = 11 : i64} {
  func.func @_project_kernel(%arg0: i32, %arg1: memref<128x128xbf16, #tpu.memory_space<vmem>>, %arg2: memref<128x128xbf16, #tpu.memory_space<vmem>>, %arg3: memref<128x128xbf16, #tpu.memory_space<vmem>>) attributes {dimension_semantics = [#tpu.dimension_semantics<parallel>], iteration_bounds = array<i64: 1>, scalar_prefetch = 0 : i64, scratch_operands = 0 : i64, tpu.core_type = #tpu.core_type<tc>, window_params = [{transform_indices = @transform_0, window_bounds = array<i64: 128, 128>}, {pipeline_mode = #tpu.pipeline_mode<synchronous>, transform_indices = @transform_1, window_bounds = array<i64: 128, 128>}, {transform_indices = @transform_2, window_bounds = array<i64: 128, 128>}]} {
    %c0 = arith.constant 0 : index
    %c0_0 = arith.constant 0 : index
    %0 = vector.load %arg1[%c0, %c0_0] : memref<128x128xbf16, #tpu.memory_space<vmem>>, vector<128x128xbf16>
    %c0_1 = arith.constant 0 : index
    %c0_2 = arith.constant 0 : index
    %1 = vector.load %arg2[%c0_1, %c0_2] : memref<128x128xbf16, #tpu.memory_space<vmem>>, vector<128x128xbf16>
    %cst = arith.constant dense<0.000000e+00> : vector<128x128xf32>
    %2 = tpu.matmul %0, %1, %cst {dimension_numbers = #tpu.dot_dimension_numbers<[1], [0], [0], [1], [0, 0, 1, 1], [], []>} : vector<128x128xbf16>, vector<128x128xbf16>, vector<128x128xf32> -> vector<128x128xf32>
    %3 = arith.truncf %2 : vector<128x128xf32> to vector<128x128xbf16>
    %c0_3 = arith.constant 0 : index
    %c0_4 = arith.constant 0 : index
    %4 = vector.load %arg3[%c0_3, %c0_4] : memref<128x128xbf16, #tpu.memory_space<vmem>>, vector<128x128xbf16>
    tpu.vector_store %arg3[%c0_3, %c0_4], %3 {strides = array<i32>} : memref<128x128xbf16, #tpu.memory_space<vmem>>, vector<128x128xbf16>,
    return
  }
  func.func @transform_0(%arg0: i32) -> (i32, i32) {
    %c0_i32 = arith.constant 0 : i32
    %c0_i32_0 = arith.constant 0 : i32
    return %arg0, %c0_i32 : i32, i32
  }
  func.func @transform_1(%arg0: i32) -> (i32, i32) {
    %c0_i32 = arith.constant 0 : i32
    %c0_i32_0 = arith.constant 0 : i32
    %c0_i32_1 = arith.constant 0 : i32
    return %c0_i32, %c0_i32_0 : i32, i32
  }
  func.func @transform_2(%arg0: i32) -> (i32, i32) {
    %c0_i32 = arith.constant 0 : i32
    %c0_i32_0 = arith.constant 0 : i32
    return %arg0, %c0_i32 : i32, i32
  }
}

module attributes {stable_mosaic.version = 11 : i64} {
  func.func @_aggregate_kernel(%arg0: i32, %arg1: i32, %arg2: memref<1x1xi32, #tpu.memory_space<smem>>, %arg3: memref<1xi32, #tpu.memory_space<smem>>, %arg4: memref<128x128xbf16, #tpu.memory_space<vmem>>, %arg5: memref<128x128xbf16, #tpu.memory_space<vmem>>, %arg6: memref<128x128xbf16, #tpu.memory_space<vmem>>, %arg7: memref<128x128xbf16, #tpu.memory_space<vmem>>, %arg8: memref<1x128xf32, #tpu.memory_space<vmem>>, %arg9: memref<128x1xf32, #tpu.memory_space<vmem>>, %arg10: memref<128x128xbf16, #tpu.memory_space<vmem>>, %arg11: memref<128x128xf32, #tpu.memory_space<vmem>>) attributes {dimension_semantics = [#tpu.dimension_semantics<parallel>, #tpu.dimension_semantics<arbitrary>], iteration_bounds = array<i64: 1, 1>, scalar_prefetch = 2 : i64, scratch_operands = 1 : i64, tpu.core_type = #tpu.core_type<tc>, window_params = [{transform_indices = @transform_0, window_bounds = array<i64: 128, 128>}, {pipeline_mode = #tpu.pipeline_mode<synchronous>, transform_indices = @transform_1, window_bounds = array<i64: 128, 128>}, {transform_indices = @transform_2, window_bounds = array<i64: 128, 128>}, {pipeline_mode = #tpu.pipeline_mode<synchronous>, transform_indices = @transform_3, window_bounds = array<i64: 128, 128>}, {pipeline_mode = #tpu.pipeline_mode<synchronous>, transform_indices = @transform_4, window_bounds = array<i64: 1, 128>}, {transform_indices = @transform_5, window_bounds = array<i64: 128, 1>}, {transform_indices = @transform_6, window_bounds = array<i64: 128, 128>}]} {
    %c0_i32 = arith.constant 0 : i32
    %0 = arith.cmpi eq, %arg1, %c0_i32 : i32
    %1 = arith.extui %0 : i1 to i32
    %c0_i32_0 = arith.constant 0 : i32
    %2 = arith.cmpi ne, %1, %c0_i32_0 : i32
    scf.if %2 {
      %cst = arith.constant 0.000000e+00 : f32
      %11 = vector.broadcast %cst : f32 to vector<128x128xf32>
      %c0 = arith.constant 0 : index
      %c0_4 = arith.constant 0 : index
      %12 = vector.load %arg11[%c0, %c0_4] : memref<128x128xf32, #tpu.memory_space<vmem>>, vector<128x128xf32>
      tpu.vector_store %arg11[%c0, %c0_4], %11 {strides = array<i32>} : memref<128x128xf32, #tpu.memory_space<vmem>>, vector<128x128xf32>,
    } else {
    }
    %3 = arith.index_cast %arg0 : i32 to index
    %4 = memref.load %arg3[%3] : memref<1xi32, #tpu.memory_space<smem>>
    %5 = arith.cmpi slt, %arg1, %4 : i32
    %6 = arith.extui %5 : i1 to i32
    %c0_i32_1 = arith.constant 0 : i32
    %7 = arith.cmpi ne, %6, %c0_i32_1 : i32
    scf.if %7 {
      %11 = arith.index_cast %arg0 : i32 to index
      %12 = arith.index_cast %arg1 : i32 to index
      %13 = memref.load %arg2[%11, %12] : memref<1x1xi32, #tpu.memory_space<smem>>
      %c128_i32 = arith.constant 128 : i32
      %14 = arith.muli %13, %c128_i32 : i32
      %15 = tpu.assume_multiple %14, 128 : i32
      %16 = arith.index_cast %15 : i32 to index
      %c0 = arith.constant 0 : index
      %17 = vector.load %arg5[%16, %c0] : memref<128x128xbf16, #tpu.memory_space<vmem>>, vector<128x128xbf16>
      %c0_4 = arith.constant 0 : index
      %c0_5 = arith.constant 0 : index
      %18 = vector.load %arg11[%c0_4, %c0_5] : memref<128x128xf32, #tpu.memory_space<vmem>>, vector<128x128xf32>
      %c0_6 = arith.constant 0 : index
      %c0_7 = arith.constant 0 : index
      %19 = vector.load %arg4[%c0_6, %c0_7] : memref<128x128xbf16, #tpu.memory_space<vmem>>, vector<128x128xbf16>
      %cst = arith.constant dense<0.000000e+00> : vector<128x128xf32>
      %20 = tpu.matmul %19, %17, %cst {dimension_numbers = #tpu.dot_dimension_numbers<[1], [0], [0], [1], [0, 0, 1, 1], [], []>} : vector<128x128xbf16>, vector<128x128xbf16>, vector<128x128xf32> -> vector<128x128xf32>
      %21 = arith.addf %18, %20 : vector<128x128xf32>
      %c0_8 = arith.constant 0 : index
      %c0_9 = arith.constant 0 : index
      %22 = vector.load %arg11[%c0_8, %c0_9] : memref<128x128xf32, #tpu.memory_space<vmem>>, vector<128x128xf32>
      tpu.vector_store %arg11[%c0_8, %c0_9], %21 {strides = array<i32>} : memref<128x128xf32, #tpu.memory_space<vmem>>, vector<128x128xf32>,
    } else {
    }
    %c0_i32_2 = arith.constant 0 : i32
    %8 = arith.cmpi eq, %arg1, %c0_i32_2 : i32
    %9 = arith.extui %8 : i1 to i32
    %c0_i32_3 = arith.constant 0 : i32
    %10 = arith.cmpi ne, %9, %c0_i32_3 : i32
    scf.if %10 {
      %c0 = arith.constant 0 : index
      %c0_4 = arith.constant 0 : index
      %11 = vector.load %arg6[%c0, %c0_4] : memref<128x128xbf16, #tpu.memory_space<vmem>>, vector<128x128xbf16>
      %c0_5 = arith.constant 0 : index
      %c0_6 = arith.constant 0 : index
      %12 = vector.load %arg7[%c0_5, %c0_6] : memref<128x128xbf16, #tpu.memory_space<vmem>>, vector<128x128xbf16>
      %cst = arith.constant dense<0.000000e+00> : vector<128x128xf32>
      %13 = tpu.matmul %11, %12, %cst {dimension_numbers = #tpu.dot_dimension_numbers<[1], [0], [0], [1], [0, 0, 1, 1], [], []>} : vector<128x128xbf16>, vector<128x128xbf16>, vector<128x128xf32> -> vector<128x128xf32>
      %c0_7 = arith.constant 0 : index
      %c0_8 = arith.constant 0 : index
      %14 = vector.load %arg8[%c0_7, %c0_8] : memref<1x128xf32, #tpu.memory_space<vmem>>, vector<1x128xf32>
      %15 = vector.broadcast %14 : vector<1x128xf32> to vector<128x128xf32>
      %16 = arith.addf %13, %15 : vector<128x128xf32>
      %c0_9 = arith.constant 0 : index
      %c0_10 = arith.constant 0 : index
      %17 = vector.load %arg11[%c0_9, %c0_10] : memref<128x128xf32, #tpu.memory_space<vmem>>, vector<128x128xf32>
      %c0_11 = arith.constant 0 : index
      %c0_12 = arith.constant 0 : index
      %18 = vector.load %arg9[%c0_11, %c0_12] : memref<128x1xf32, #tpu.memory_space<vmem>>, vector<128x1xf32>
      %19 = vector.broadcast %18 : vector<128x1xf32> to vector<128x128xf32>
      %20 = arith.mulf %17, %19 : vector<128x128xf32>
      %21 = arith.addf %20, %16 : vector<128x128xf32>
      %cst_13 = arith.constant 0.000000e+00 : f32
      %22 = vector.broadcast %cst_13 : f32 to vector<128x128xf32>
      %23 = arith.maximumf %21, %22 : vector<128x128xf32>
      %24 = arith.truncf %23 : vector<128x128xf32> to vector<128x128xbf16>
      %c0_14 = arith.constant 0 : index
      %c0_15 = arith.constant 0 : index
      %25 = vector.load %arg10[%c0_14, %c0_15] : memref<128x128xbf16, #tpu.memory_space<vmem>>, vector<128x128xbf16>
      tpu.vector_store %arg10[%c0_14, %c0_15], %24 {strides = array<i32>} : memref<128x128xbf16, #tpu.memory_space<vmem>>, vector<128x128xbf16>,
    } else {
    }
    return
  }
  func.func @transform_0(%arg0: i32, %arg1: i32, %arg2: memref<1x1xi32, #tpu.memory_space<smem>>, %arg3: memref<1xi32, #tpu.memory_space<smem>>) -> (i32, i32) {
    %0 = arith.index_cast %arg0 : i32 to index
    %1 = arith.index_cast %arg1 : i32 to index
    %2 = memref.load %arg2[%0, %1] : memref<1x1xi32, #tpu.memory_space<smem>>
    %c0_i32 = arith.constant 0 : i32
    return %arg0, %2 : i32, i32
  }
  func.func @transform_1(%arg0: i32, %arg1: i32, %arg2: memref<1x1xi32, #tpu.memory_space<smem>>, %arg3: memref<1xi32, #tpu.memory_space<smem>>) -> (i32, i32) {
    %c0_i32 = arith.constant 0 : i32
    %c0_i32_0 = arith.constant 0 : i32
    %c0_i32_1 = arith.constant 0 : i32
    return %c0_i32, %c0_i32_0 : i32, i32
  }
  func.func @transform_2(%arg0: i32, %arg1: i32, %arg2: memref<1x1xi32, #tpu.memory_space<smem>>, %arg3: memref<1xi32, #tpu.memory_space<smem>>) -> (i32, i32) {
    %c0_i32 = arith.constant 0 : i32
    %c0_i32_0 = arith.constant 0 : i32
    return %arg0, %c0_i32 : i32, i32
  }
  func.func @transform_3(%arg0: i32, %arg1: i32, %arg2: memref<1x1xi32, #tpu.memory_space<smem>>, %arg3: memref<1xi32, #tpu.memory_space<smem>>) -> (i32, i32) {
    %c0_i32 = arith.constant 0 : i32
    %c0_i32_0 = arith.constant 0 : i32
    %c0_i32_1 = arith.constant 0 : i32
    return %c0_i32, %c0_i32_0 : i32, i32
  }
  func.func @transform_4(%arg0: i32, %arg1: i32, %arg2: memref<1x1xi32, #tpu.memory_space<smem>>, %arg3: memref<1xi32, #tpu.memory_space<smem>>) -> (i32, i32) {
    %c0_i32 = arith.constant 0 : i32
    %c0_i32_0 = arith.constant 0 : i32
    %c0_i32_1 = arith.constant 0 : i32
    return %c0_i32, %c0_i32_0 : i32, i32
  }
  func.func @transform_5(%arg0: i32, %arg1: i32, %arg2: memref<1x1xi32, #tpu.memory_space<smem>>, %arg3: memref<1xi32, #tpu.memory_space<smem>>) -> (i32, i32) {
    %c0_i32 = arith.constant 0 : i32
    %c0_i32_0 = arith.constant 0 : i32
    return %arg0, %c0_i32 : i32, i32
  }
  func.func @transform_6(%arg0: i32, %arg1: i32, %arg2: memref<1x1xi32, #tpu.memory_space<smem>>, %arg3: memref<1xi32, #tpu.memory_space<smem>>) -> (i32, i32) {
    %c0_i32 = arith.constant 0 : i32
    %c0_i32_0 = arith.constant 0 : i32
    return %arg0, %c0_i32 : i32, i32
  }
}

module attributes {stable_mosaic.version = 11 : i64} {
  func.func @_aggregate_kernel(%arg0: i32, %arg1: i32, %arg2: memref<1x1xi32, #tpu.memory_space<smem>>, %arg3: memref<1xi32, #tpu.memory_space<smem>>, %arg4: memref<128x128xbf16, #tpu.memory_space<vmem>>, %arg5: memref<128x128xbf16, #tpu.memory_space<vmem>>, %arg6: memref<128x128xbf16, #tpu.memory_space<vmem>>, %arg7: memref<128x128xbf16, #tpu.memory_space<vmem>>, %arg8: memref<1x128xf32, #tpu.memory_space<vmem>>, %arg9: memref<128x1xf32, #tpu.memory_space<vmem>>, %arg10: memref<128x128xf32, #tpu.memory_space<vmem>>, %arg11: memref<128x128xf32, #tpu.memory_space<vmem>>) attributes {dimension_semantics = [#tpu.dimension_semantics<parallel>, #tpu.dimension_semantics<arbitrary>], iteration_bounds = array<i64: 1, 1>, scalar_prefetch = 2 : i64, scratch_operands = 1 : i64, tpu.core_type = #tpu.core_type<tc>, window_params = [{transform_indices = @transform_0, window_bounds = array<i64: 128, 128>}, {pipeline_mode = #tpu.pipeline_mode<synchronous>, transform_indices = @transform_1, window_bounds = array<i64: 128, 128>}, {transform_indices = @transform_2, window_bounds = array<i64: 128, 128>}, {pipeline_mode = #tpu.pipeline_mode<synchronous>, transform_indices = @transform_3, window_bounds = array<i64: 128, 128>}, {pipeline_mode = #tpu.pipeline_mode<synchronous>, transform_indices = @transform_4, window_bounds = array<i64: 1, 128>}, {transform_indices = @transform_5, window_bounds = array<i64: 128, 1>}, {transform_indices = @transform_6, window_bounds = array<i64: 128, 128>}]} {
    %c0_i32 = arith.constant 0 : i32
    %0 = arith.cmpi eq, %arg1, %c0_i32 : i32
    %1 = arith.extui %0 : i1 to i32
    %c0_i32_0 = arith.constant 0 : i32
    %2 = arith.cmpi ne, %1, %c0_i32_0 : i32
    scf.if %2 {
      %cst = arith.constant 0.000000e+00 : f32
      %11 = vector.broadcast %cst : f32 to vector<128x128xf32>
      %c0 = arith.constant 0 : index
      %c0_4 = arith.constant 0 : index
      %12 = vector.load %arg11[%c0, %c0_4] : memref<128x128xf32, #tpu.memory_space<vmem>>, vector<128x128xf32>
      tpu.vector_store %arg11[%c0, %c0_4], %11 {strides = array<i32>} : memref<128x128xf32, #tpu.memory_space<vmem>>, vector<128x128xf32>,
    } else {
    }
    %3 = arith.index_cast %arg0 : i32 to index
    %4 = memref.load %arg3[%3] : memref<1xi32, #tpu.memory_space<smem>>
    %5 = arith.cmpi slt, %arg1, %4 : i32
    %6 = arith.extui %5 : i1 to i32
    %c0_i32_1 = arith.constant 0 : i32
    %7 = arith.cmpi ne, %6, %c0_i32_1 : i32
    scf.if %7 {
      %11 = arith.index_cast %arg0 : i32 to index
      %12 = arith.index_cast %arg1 : i32 to index
      %13 = memref.load %arg2[%11, %12] : memref<1x1xi32, #tpu.memory_space<smem>>
      %c128_i32 = arith.constant 128 : i32
      %14 = arith.muli %13, %c128_i32 : i32
      %15 = tpu.assume_multiple %14, 128 : i32
      %16 = arith.index_cast %15 : i32 to index
      %c0 = arith.constant 0 : index
      %17 = vector.load %arg5[%16, %c0] : memref<128x128xbf16, #tpu.memory_space<vmem>>, vector<128x128xbf16>
      %c0_4 = arith.constant 0 : index
      %c0_5 = arith.constant 0 : index
      %18 = vector.load %arg11[%c0_4, %c0_5] : memref<128x128xf32, #tpu.memory_space<vmem>>, vector<128x128xf32>
      %c0_6 = arith.constant 0 : index
      %c0_7 = arith.constant 0 : index
      %19 = vector.load %arg4[%c0_6, %c0_7] : memref<128x128xbf16, #tpu.memory_space<vmem>>, vector<128x128xbf16>
      %cst = arith.constant dense<0.000000e+00> : vector<128x128xf32>
      %20 = tpu.matmul %19, %17, %cst {dimension_numbers = #tpu.dot_dimension_numbers<[1], [0], [0], [1], [0, 0, 1, 1], [], []>} : vector<128x128xbf16>, vector<128x128xbf16>, vector<128x128xf32> -> vector<128x128xf32>
      %21 = arith.addf %18, %20 : vector<128x128xf32>
      %c0_8 = arith.constant 0 : index
      %c0_9 = arith.constant 0 : index
      %22 = vector.load %arg11[%c0_8, %c0_9] : memref<128x128xf32, #tpu.memory_space<vmem>>, vector<128x128xf32>
      tpu.vector_store %arg11[%c0_8, %c0_9], %21 {strides = array<i32>} : memref<128x128xf32, #tpu.memory_space<vmem>>, vector<128x128xf32>,
    } else {
    }
    %c0_i32_2 = arith.constant 0 : i32
    %8 = arith.cmpi eq, %arg1, %c0_i32_2 : i32
    %9 = arith.extui %8 : i1 to i32
    %c0_i32_3 = arith.constant 0 : i32
    %10 = arith.cmpi ne, %9, %c0_i32_3 : i32
    scf.if %10 {
      %c0 = arith.constant 0 : index
      %c0_4 = arith.constant 0 : index
      %11 = vector.load %arg6[%c0, %c0_4] : memref<128x128xbf16, #tpu.memory_space<vmem>>, vector<128x128xbf16>
      %c0_5 = arith.constant 0 : index
      %c0_6 = arith.constant 0 : index
      %12 = vector.load %arg7[%c0_5, %c0_6] : memref<128x128xbf16, #tpu.memory_space<vmem>>, vector<128x128xbf16>
      %cst = arith.constant dense<0.000000e+00> : vector<128x128xf32>
      %13 = tpu.matmul %11, %12, %cst {dimension_numbers = #tpu.dot_dimension_numbers<[1], [0], [0], [1], [0, 0, 1, 1], [], []>} : vector<128x128xbf16>, vector<128x128xbf16>, vector<128x128xf32> -> vector<128x128xf32>
      %c0_7 = arith.constant 0 : index
      %c0_8 = arith.constant 0 : index
      %14 = vector.load %arg8[%c0_7, %c0_8] : memref<1x128xf32, #tpu.memory_space<vmem>>, vector<1x128xf32>
      %15 = vector.broadcast %14 : vector<1x128xf32> to vector<128x128xf32>
      %16 = arith.addf %13, %15 : vector<128x128xf32>
      %c0_9 = arith.constant 0 : index
      %c0_10 = arith.constant 0 : index
      %17 = vector.load %arg11[%c0_9, %c0_10] : memref<128x128xf32, #tpu.memory_space<vmem>>, vector<128x128xf32>
      %c0_11 = arith.constant 0 : index
      %c0_12 = arith.constant 0 : index
      %18 = vector.load %arg9[%c0_11, %c0_12] : memref<128x1xf32, #tpu.memory_space<vmem>>, vector<128x1xf32>
      %19 = vector.broadcast %18 : vector<128x1xf32> to vector<128x128xf32>
      %20 = arith.mulf %17, %19 : vector<128x128xf32>
      %21 = arith.addf %20, %16 : vector<128x128xf32>
      %22 = tpu.iota {dimensions = array<i32: 1>} : vector<128x128xi32>
      %c4_i32 = arith.constant 4 : i32
      %23 = vector.broadcast %c4_i32 : i32 to vector<128x128xi32>
      %24 = arith.cmpi slt, %22, %23 : vector<128x128xi32>
      %cst_13 = arith.constant 0xFF800000 : f32
      %25 = vector.broadcast %cst_13 : f32 to vector<128x128xf32>
      %26 = arith.select %24, %21, %25 : vector<128x128xi1>, vector<128x128xf32>
      %cst_14 = arith.constant dense<0xFF800000> : vector<128xf32>
      %27 = vector.multi_reduction <maximumf>, %26, %cst_14 [1] : vector<128x128xf32> to vector<128xf32>
      %28 = vector.shape_cast %27 : vector<128xf32> to vector<128x1xf32>
      %29 = vector.broadcast %28 : vector<128x1xf32> to vector<128x128xf32>
      %30 = arith.subf %26, %29 : vector<128x128xf32>
      %31 = math.exp %30 : vector<128x128xf32>
      %cst_15 = arith.constant dense<0.000000e+00> : vector<128xf32>
      %32 = vector.multi_reduction <add>, %31, %cst_15 [1] : vector<128x128xf32> to vector<128xf32>
      %33 = vector.shape_cast %32 : vector<128xf32> to vector<128x1xf32>
      %34 = math.log %33 : vector<128x1xf32>
      %35 = vector.broadcast %34 : vector<128x1xf32> to vector<128x128xf32>
      %36 = arith.subf %30, %35 : vector<128x128xf32>
      %c0_16 = arith.constant 0 : index
      %c0_17 = arith.constant 0 : index
      %37 = vector.load %arg10[%c0_16, %c0_17] : memref<128x128xf32, #tpu.memory_space<vmem>>, vector<128x128xf32>
      tpu.vector_store %arg10[%c0_16, %c0_17], %36 {strides = array<i32>} : memref<128x128xf32, #tpu.memory_space<vmem>>, vector<128x128xf32>,
    } else {
    }
    return
  }
  func.func @transform_0(%arg0: i32, %arg1: i32, %arg2: memref<1x1xi32, #tpu.memory_space<smem>>, %arg3: memref<1xi32, #tpu.memory_space<smem>>) -> (i32, i32) {
    %0 = arith.index_cast %arg0 : i32 to index
    %1 = arith.index_cast %arg1 : i32 to index
    %2 = memref.load %arg2[%0, %1] : memref<1x1xi32, #tpu.memory_space<smem>>
    %c0_i32 = arith.constant 0 : i32
    return %arg0, %2 : i32, i32
  }
  func.func @transform_1(%arg0: i32, %arg1: i32, %arg2: memref<1x1xi32, #tpu.memory_space<smem>>, %arg3: memref<1xi32, #tpu.memory_space<smem>>) -> (i32, i32) {
    %c0_i32 = arith.constant 0 : i32
    %c0_i32_0 = arith.constant 0 : i32
    %c0_i32_1 = arith.constant 0 : i32
    return %c0_i32, %c0_i32_0 : i32, i32
  }
  func.func @transform_2(%arg0: i32, %arg1: i32, %arg2: memref<1x1xi32, #tpu.memory_space<smem>>, %arg3: memref<1xi32, #tpu.memory_space<smem>>) -> (i32, i32) {
    %c0_i32 = arith.constant 0 : i32
    %c0_i32_0 = arith.constant 0 : i32
    return %arg0, %c0_i32 : i32, i32
  }
  func.func @transform_3(%arg0: i32, %arg1: i32, %arg2: memref<1x1xi32, #tpu.memory_space<smem>>, %arg3: memref<1xi32, #tpu.memory_space<smem>>) -> (i32, i32) {
    %c0_i32 = arith.constant 0 : i32
    %c0_i32_0 = arith.constant 0 : i32
    %c0_i32_1 = arith.constant 0 : i32
    return %c0_i32, %c0_i32_0 : i32, i32
  }
  func.func @transform_4(%arg0: i32, %arg1: i32, %arg2: memref<1x1xi32, #tpu.memory_space<smem>>, %arg3: memref<1xi32, #tpu.memory_space<smem>>) -> (i32, i32) {
    %c0_i32 = arith.constant 0 : i32
    %c0_i32_0 = arith.constant 0 : i32
    %c0_i32_1 = arith.constant 0 : i32
    return %c0_i32, %c0_i32_0 : i32, i32
  }
  func.func @transform_5(%arg0: i32, %arg1: i32, %arg2: memref<1x1xi32, #tpu.memory_space<smem>>, %arg3: memref<1xi32, #tpu.memory_space<smem>>) -> (i32, i32) {
    %c0_i32 = arith.constant 0 : i32
    %c0_i32_0 = arith.constant 0 : i32
    return %arg0, %c0_i32 : i32, i32
  }
  func.func @transform_6(%arg0: i32, %arg1: i32, %arg2: memref<1x1xi32, #tpu.memory_space<smem>>, %arg3: memref<1xi32, #tpu.memory_space<smem>>) -> (i32, i32) {
    %c0_i32 = arith.constant 0 : i32
    %c0_i32_0 = arith.constant 0 : i32
    return %arg0, %c0_i32 : i32, i32
  }
}

</mosaic_0001>

<llo_original>
// kernel: graphsage_forward.4
$region0: #{graphsage_forward.4}
  #allocation0 [shape = 'u32[]', space=smem, size = 0x4, offset = 0x4, fixed_abs, tag = 'smem constant byte address 0x4 - core index']
  #allocation1 [shape = 'u32[144,128]{1,0:T(1,128)}', space=vmem, size = 0x12000, scoped, tag = 'internal scratch']
  %s0 = inlined_call_operand.vmem [shape: bf16[128,128], index: 0, kind: input, shape index: {}]
  %s1 = inlined_call_operand.vmem [shape: bf16[128,128], index: 1, kind: input, shape index: {}]
  %s2 = inlined_call_operand.vmem [shape: bf16[128,128], index: 2, kind: output, shape index: {}]
  %s3 = sld [smem:[#allocation0]]
  $region18: #{graphsage_forward.4} parent=0
    _
  %s5 = ssub.s32 1, %s3
  %s6 = scalar_select 0, %s5, %s3
  // Predicated region
  $region2: #{graphsage_forward.4} parent=0 // pred_check
    _
  $region3: #{graphsage_forward.4} parent=0 // pred_check_branch
    %8 = sbr.rel (0) target = $region5
  $region4: #{graphsage_forward.4} parent=0 // pred_region
    _
  $region5: #{graphsage_forward.4} parent=0 // pred_fallthru
    _
  // Predicated region
  $region6: #{graphsage_forward.4} parent=0 // pred_check
    _
  $region7: #{graphsage_forward.4} parent=0 // pred_check_branch
    %10 = sbr.rel (0) target = $region9
  $region8: #{graphsage_forward.4} parent=0 // pred_region
    _
  $region9: #{graphsage_forward.4} parent=0 // pred_fallthru
    _
  %v12 = vld [vmem:[%s0] sm:$0xf]
  %v13 = vld [vmem:[%s0 + $0x4] sm:$0xf]
  %v14 = vld [vmem:[%s0 + $0x8] sm:$0xf]
  %v15 = vld [vmem:[%s0 + $0xc] sm:$0xf]
  %v16 = vld [vmem:[%s0 + $0x10] sm:$0xf]
  %v17 = vld [vmem:[%s0 + $0x14] sm:$0xf]
  %v18 = vld [vmem:[%s0 + $0x18] sm:$0xf]
  %v19 = vld [vmem:[%s0 + $0x1c] sm:$0xf]
  %v20 = vld [vmem:[%s0 + $0x20] sm:$0xf]
  %v21 = vld [vmem:[%s0 + $0x24] sm:$0xf]
  %v22 = vld [vmem:[%s0 + $0x28] sm:$0xf]
  %v23 = vld [vmem:[%s0 + $0x2c] sm:$0xf]
  %v24 = vld [vmem:[%s0 + $0x30] sm:$0xf]
  %v25 = vld [vmem:[%s0 + $0x34] sm:$0xf]
  %v26 = vld [vmem:[%s0 + $0x38] sm:$0xf]
  %v27 = vld [vmem:[%s0 + $0x3c] sm:$0xf]
  %v28 = vld [vmem:[%s1] sm:$0xf]
  %v29 = vld [vmem:[%s1 + $0x4] sm:$0xf]
  %v30 = vld [vmem:[%s1 + $0x8] sm:$0xf]
  %v31 = vld [vmem:[%s1 + $0xc] sm:$0xf]
  %v32 = vld [vmem:[%s1 + $0x10] sm:$0xf]
  %v33 = vld [vmem:[%s1 + $0x14] sm:$0xf]
  %v34 = vld [vmem:[%s1 + $0x18] sm:$0xf]
  %v35 = vld [vmem:[%s1 + $0x1c] sm:$0xf]
  %v36 = vld [vmem:[%s1 + $0x20] sm:$0xf]
  %v37 = vld [vmem:[%s1 + $0x24] sm:$0xf]
  %v38 = vld [vmem:[%s1 + $0x28] sm:$0xf]
  %v39 = vld [vmem:[%s1 + $0x2c] sm:$0xf]
  %v40 = vld [vmem:[%s1 + $0x30] sm:$0xf]
  %v41 = vld [vmem:[%s1 + $0x34] sm:$0xf]
  %v42 = vld [vmem:[%s1 + $0x38] sm:$0xf]
  %v43 = vld [vmem:[%s1 + $0x3c] sm:$0xf]
  %v60 = vunpack.c.l.b16 %v12
  %v61 = vunpack.c.l.b16 %v13
  %v62 = vunpack.c.l.b16 %v14
  %v63 = vunpack.c.l.b16 %v15
  %v64 = vunpack.c.l.b16 %v16
  %v65 = vunpack.c.l.b16 %v17
  %v66 = vunpack.c.l.b16 %v18
  %v67 = vunpack.c.l.b16 %v19
  %v68 = vunpack.c.l.b16 %v20
  %v69 = vunpack.c.l.b16 %v21
  %v70 = vunpack.c.l.b16 %v22
  %v71 = vunpack.c.l.b16 %v23
  %v72 = vunpack.c.l.b16 %v24
  %v73 = vunpack.c.l.b16 %v25
  %v74 = vunpack.c.l.b16 %v26
  %v75 = vunpack.c.l.b16 %v27
  %v76 = vpack.c.b16 %v61, %v60
  %v77 = vpack.c.b16 %v63, %v62
  %v78 = vpack.c.b16 %v65, %v64
  %v79 = vpack.c.b16 %v67, %v66
  %v80 = vpack.c.b16 %v69, %v68
  %v81 = vpack.c.b16 %v71, %v70
  %v82 = vpack.c.b16 %v73, %v72
  %v83 = vpack.c.b16 %v75, %v74
  %v108 = vunpack.c.l.b16 %v28
  %v109 = vunpack.c.l.b16 %v29
  %v110 = vunpack.c.l.b16 %v30
  %v111 = vunpack.c.l.b16 %v31
  %v112 = vunpack.c.l.b16 %v32
  %v113 = vunpack.c.l.b16 %v33
  %v114 = vunpack.c.l.b16 %v34
  %v115 = vunpack.c.l.b16 %v35
  %v116 = vunpack.c.l.b16 %v36
  %v117 = vunpack.c.l.b16 %v37
  %v118 = vunpack.c.l.b16 %v38
  %v119 = vunpack.c.l.b16 %v39
  %v120 = vunpack.c.l.b16 %v40
  %v121 = vunpack.c.l.b16 %v41
  %v122 = vunpack.c.l.b16 %v42
  %v123 = vunpack.c.l.b16 %v43
  %v124 = vpack.c.b16 %v109, %v108
  %v125 = vpack.c.b16 %v111, %v110
  %v126 = vpack.c.b16 %v113, %v112
  %v127 = vpack.c.b16 %v115, %v114
  %v128 = vpack.c.b16 %v117, %v116
  %v129 = vpack.c.b16 %v119, %v118
  %v130 = vpack.c.b16 %v121, %v120
  %v131 = vpack.c.b16 %v123, %v122
  %140 = vmatprep.subr.bf16.mxu0 0
  %141 = vmatpush1.bf16.msra.mxu0 %v124
  %142 = vmatprep.subr.bf16.mxu0 0
  %143 = vmatpush1.bf16.msra.mxu0 %v125
  %144 = vmatprep.subr.bf16.mxu0 0
  %145 = vmatpush1.bf16.msra.mxu0 %v126
  %146 = vmatprep.subr.bf16.mxu0 0
  %147 = vmatpush1.bf16.msra.mxu0 %v127
  %148 = vmatprep.subr.bf16.mxu0 0
  %149 = vmatpush1.bf16.msra.mxu0 %v128
  %150 = vmatprep.subr.bf16.mxu0 0
  %151 = vmatpush1.bf16.msra.mxu0 %v129
  %152 = vmatprep.subr.bf16.mxu0 0
  %153 = vmatpush1.bf16.msra.mxu0 %v130
  %154 = vmatprep.subr.bf16.mxu0 0
  %155 = vmatpush1.bf16.msra.mxu0 %v131
  %156 = vmatprep.subr.bf16.mxu0 0
  %157 = vmatpush1.bf16.msra.mxu0 0
  %158 = vmatprep.subr.bf16.mxu0 0
  %159 = vmatpush1.bf16.msra.mxu0 0
  %160 = vmatprep.subr.bf16.mxu0 0
  %161 = vmatpush1.bf16.msra.mxu0 0
  %162 = vmatprep.subr.bf16.mxu0 0
  %163 = vmatpush1.bf16.msra.mxu0 0
  %164 = vmatprep.subr.bf16.mxu0 0
  %165 = vmatpush1.bf16.msra.mxu0 0
  %166 = vmatprep.subr.bf16.mxu0 0
  %167 = vmatpush1.bf16.msra.mxu0 0
  %168 = vmatprep.subr.bf16.mxu0 0
  %169 = vmatpush1.bf16.msra.mxu0 0
  %170 = vmatprep.subr.bf16.mxu0 0
  %171 = vmatpush1.bf16.msra.mxu0 0
  %172 = vmatprep.mubr.bf16.mxu0 0
  %173 = vmatmul.mubr.bf16.gmra.mrb[0].mxu0 %v76
  %v174 = vpop.f32.mrb[0].mxu0
  %v175 = vadd.f32 0.0, %v174
  %v176 = vpop.f32.mrb[0].mxu0
  %v177 = vpop.f32.mrb[0].mxu0
  %v178 = vadd.f32 0.0, %v177
  %v179 = vpop.f32.mrb[0].mxu0
  %180 = vmatprep.mubr.bf16.mxu0 0
  %181 = vmatmul.mubr.bf16.gmra.mrb[0].mxu0 %v77
  %v182 = vpop.f32.mrb[0].mxu0
  %v183 = vadd.f32 0.0, %v182
  %v184 = vpop.f32.mrb[0].mxu0
  %v185 = vpop.f32.mrb[0].mxu0
  %v186 = vadd.f32 0.0, %v185
  %v187 = vpop.f32.mrb[0].mxu0
  %188 = vmatprep.mubr.bf16.mxu0 0
  %189 = vmatmul.mubr.bf16.gmra.mrb[0].mxu0 %v78
  %v190 = vpop.f32.mrb[0].mxu0
  %v191 = vadd.f32 0.0, %v190
  %v192 = vpop.f32.mrb[0].mxu0
  %v193 = vpop.f32.mrb[0].mxu0
  %v194 = vadd.f32 0.0, %v193
  %v195 = vpop.f32.mrb[0].mxu0
  %196 = vmatprep.mubr.bf16.mxu0 0
  %197 = vmatmul.mubr.bf16.gmra.mrb[0].mxu0 %v79
  %v198 = vpop.f32.mrb[0].mxu0
  %v199 = vadd.f32 0.0, %v198
  %v200 = vpop.f32.mrb[0].mxu0
  %v201 = vpop.f32.mrb[0].mxu0
  %v202 = vadd.f32 0.0, %v201
  %v203 = vpop.f32.mrb[0].mxu0
  %204 = vmatprep.mubr.bf16.mxu0 0
  %205 = vmatmul.mubr.bf16.gmra.mrb[0].mxu0 %v80
  %v206 = vpop.f32.mrb[0].mxu0
  %v207 = vadd.f32 0.0, %v206
  %v208 = vpop.f32.mrb[0].mxu0
  %v209 = vpop.f32.mrb[0].mxu0
  %v210 = vadd.f32 0.0, %v209
  %v211 = vpop.f32.mrb[0].mxu0
  %212 = vmatprep.mubr.bf16.mxu0 0
  %213 = vmatmul.mubr.bf16.gmra.mrb[0].mxu0 %v81
  %v214 = vpop.f32.mrb[0].mxu0
  %v215 = vadd.f32 0.0, %v214
  %v216 = vpop.f32.mrb[0].mxu0
  %v217 = vpop.f32.mrb[0].mxu0
  %v218 = vadd.f32 0.0, %v217
  %v219 = vpop.f32.mrb[0].mxu0
  %220 = vmatprep.mubr.bf16.mxu0 0
  %221 = vmatmul.mubr.bf16.gmra.mrb[0].mxu0 %v82
  %v222 = vpop.f32.mrb[0].mxu0
  %v223 = vadd.f32 0.0, %v222
  %v224 = vpop.f32.mrb[0].mxu0
  %v225 = vpop.f32.mrb[0].mxu0
  %v226 = vadd.f32 0.0, %v225
  %v227 = vpop.f32.mrb[0].mxu0
  %228 = vmatprep.mubr.bf16.mxu0 0
  %229 = vmatmul.mubr.bf16.gmra.mrb[0].mxu0 %v83
  %v230 = vpop.f32.mrb[0].mxu0
  %v231 = vadd.f32 0.0, %v230
  %v232 = vpop.f32.mrb[0].mxu0
  %v233 = vpop.f32.mrb[0].mxu0
  %v234 = vadd.f32 0.0, %v233
  %v235 = vpop.f32.mrb[0].mxu0
  %236 = vdwg.mxu0
  %v237 = vpack.c.bf16 %v178, %v175
  %v238 = vpack.c.bf16 %v186, %v183
  %v239 = vpack.c.bf16 %v194, %v191
  %v240 = vpack.c.bf16 %v202, %v199
  %v241 = vpack.c.bf16 %v210, %v207
  %v242 = vpack.c.bf16 %v218, %v215
  %v243 = vpack.c.bf16 %v226, %v223
  %v244 = vpack.c.bf16 %v234, %v231
  %v253 = vunpack.c.l.b16 %v237
  %v254 = vunpack.c.h.b16 %v237
  %v255 = vunpack.c.l.b16 %v238
  %v256 = vunpack.c.h.b16 %v238
  %v257 = vunpack.c.l.b16 %v239
  %v258 = vunpack.c.h.b16 %v239
  %v259 = vunpack.c.l.b16 %v240
  %v260 = vunpack.c.h.b16 %v240
  %v261 = vunpack.c.l.b16 %v241
  %v262 = vunpack.c.h.b16 %v241
  %v263 = vunpack.c.l.b16 %v242
  %v264 = vunpack.c.h.b16 %v242
  %v265 = vunpack.c.l.b16 %v243
  %v266 = vunpack.c.h.b16 %v243
  %v267 = vunpack.c.l.b16 %v244
  %v268 = vunpack.c.h.b16 %v244
  %v269 = vpack.c.b16 %v253, %v253
  %v270 = vpack.c.b16 %v254, %v254
  %v271 = vpack.c.b16 %v255, %v255
  %v272 = vpack.c.b16 %v256, %v256
  %v273 = vpack.c.b16 %v257, %v257
  %v274 = vpack.c.b16 %v258, %v258
  %v275 = vpack.c.b16 %v259, %v259
  %v276 = vpack.c.b16 %v260, %v260
  %v277 = vpack.c.b16 %v261, %v261
  %v278 = vpack.c.b16 %v262, %v262
  %v279 = vpack.c.b16 %v263, %v263
  %v280 = vpack.c.b16 %v264, %v264
  %v281 = vpack.c.b16 %v265, %v265
  %v282 = vpack.c.b16 %v266, %v266
  %v283 = vpack.c.b16 %v267, %v267
  %v284 = vpack.c.b16 %v268, %v268
  %301 = vst [vmem:[%s2] sm:$0xf] %v269
  %302 = vst [vmem:[%s2 + $0x4] sm:$0xf] %v270
  %303 = vst [vmem:[%s2 + $0x8] sm:$0xf] %v271
  %304 = vst [vmem:[%s2 + $0xc] sm:$0xf] %v272
  %305 = vst [vmem:[%s2 + $0x10] sm:$0xf] %v273
  %306 = vst [vmem:[%s2 + $0x14] sm:$0xf] %v274
  %307 = vst [vmem:[%s2 + $0x18] sm:$0xf] %v275
  %308 = vst [vmem:[%s2 + $0x1c] sm:$0xf] %v276
  %309 = vst [vmem:[%s2 + $0x20] sm:$0xf] %v277
  %310 = vst [vmem:[%s2 + $0x24] sm:$0xf] %v278
  %311 = vst [vmem:[%s2 + $0x28] sm:$0xf] %v279
  %312 = vst [vmem:[%s2 + $0x2c] sm:$0xf] %v280
  %313 = vst [vmem:[%s2 + $0x30] sm:$0xf] %v281
  %314 = vst [vmem:[%s2 + $0x34] sm:$0xf] %v282
  %315 = vst [vmem:[%s2 + $0x38] sm:$0xf] %v283
  %316 = vst [vmem:[%s2 + $0x3c] sm:$0xf] %v284
  // Predicated region
  $region10: #{graphsage_forward.4} parent=0 // pred_check
    _
  $region11: #{graphsage_forward.4} parent=0 // pred_check_branch
    %318 = sbr.rel (0) target = $region13
  $region12: #{graphsage_forward.4} parent=0 // pred_region
    _
  $region13: #{graphsage_forward.4} parent=0 // pred_fallthru
    _
  // Predicated region
  $region14: #{graphsage_forward.4} parent=0 // pred_check
    _
  $region15: #{graphsage_forward.4} parent=0 // pred_check_branch
    %320 = sbr.rel (0) target = $region17
  $region16: #{graphsage_forward.4} parent=0 // pred_region
    _
  $region17: #{graphsage_forward.4} parent=0 // pred_fallthru
    _

// kernel: graphsage_forward.7
$region0: #{graphsage_forward.7}
  #allocation0 [shape = 'u32[]', space=smem, size = 0x4, offset = 0x4, fixed_abs, tag = 'smem constant byte address 0x4 - core index']
  #allocation1 [shape = 'u32[144,128]{1,0:T(1,128)}', space=vmem, size = 0x12000, scoped, tag = 'internal scratch']
  #allocation2 [shape = 'f32[128,128]{1,0:T(8,128)}', space=vmem, size = 0x10000, scoped, tag = 'scratch operand']
  #allocation3 [shape = 's32[1]{0}', space=sflag, size = 0x4, scoped, tag = 'scoped memory for graphsage_forward.7']
  #allocation4 [shape = 's32[1,1]{1,0:T(1,128)S(6)}', space=smem, size = 0x200, scoped, tag = 'prefetched SMEM operand 0']
  #allocation5 [shape = 's32[1]{0:T(128)S(6)}', space=smem, size = 0x200, scoped, tag = 'prefetched SMEM operand 1']
  %s0 = inlined_call_operand.<no memory space> [shape: s32[1,1], index: 0, kind: input, shape index: {}]
  %s1 = inlined_call_operand.<no memory space> [shape: s32[1], index: 1, kind: input, shape index: {}]
  %s2 = inlined_call_operand.vmem [shape: bf16[128,128], index: 2, kind: input, shape index: {}]
  %s3 = inlined_call_operand.vmem [shape: bf16[128,128], index: 3, kind: input, shape index: {}]
  %s4 = inlined_call_operand.vmem [shape: bf16[128,128], index: 4, kind: input, shape index: {}]
  %s5 = inlined_call_operand.vmem [shape: bf16[128,128], index: 5, kind: input, shape index: {}]
  %s6 = inlined_call_operand.vmem [shape: f32[1,128], index: 6, kind: input, shape index: {}]
  %s7 = inlined_call_operand.vmem [shape: f32[128,1], index: 7, kind: input, shape index: {}]
  %s8 = inlined_call_operand.vmem [shape: f32[128,128], index: 8, kind: output, shape index: {}]
  %s9 = sld [smem:[#allocation0]]
  $region46: #{graphsage_forward.7} parent=0
    _
  %s11 = ssub.s32 1, %s9
  %s12 = scalar_select 0, %s11, %s9
  %13 = sst [smem:[#allocation4]] %s0
  %14 = sst [smem:[#allocation5]] %s1
  // Predicated region
  $region2: #{graphsage_forward.7} parent=0 // pred_check
    _
  $region3: #{graphsage_forward.7} parent=0 // pred_check_branch
    %16 = sbr.rel (0) target = $region5
  $region4: #{graphsage_forward.7} parent=0 // pred_region
    %s17 = sadd.s32 0, 0
    %s18 = smul.u32 %s17, 128
    %s19 = sadd.s32 %s18, 0
    %s20 = sld [smem:[#allocation4 + %s19]]
    %p21 = scmp.lt.s32.totalorder %s20, 0
    %s22 = scalar_select %p21, %s20, 0
    %s23 = smul.addr %s22, 4
    %s24 = scalar_lea.vmem %s2, %s23
    %s25 = sadd.s32 0, 0
    %s26 = smul.u32 %s25, 128
    %s27 = sadd.s32 %s26, 0
    %s28 = sld [smem:[#allocation4 + %s27]]
  $region5: #{graphsage_forward.7} parent=0 // pred_fallthru
    _
  // Predicated region
  $region6: #{graphsage_forward.7} parent=0 // pred_check
    _
  $region7: #{graphsage_forward.7} parent=0 // pred_check_branch
    %30 = sbr.rel (0) target = $region9
  $region8: #{graphsage_forward.7} parent=0 // pred_region
    _
  $region9: #{graphsage_forward.7} parent=0 // pred_fallthru
    _
  // Predicated region
  $region10: #{graphsage_forward.7} parent=0 // pred_check
    _
  $region11: #{graphsage_forward.7} parent=0 // pred_check_branch
    %32 = sbr.rel (0) target = $region13
  $region12: #{graphsage_forward.7} parent=0 // pred_region
    _
  $region13: #{graphsage_forward.7} parent=0 // pred_fallthru
    _
  // Predicated region
  $region14: #{graphsage_forward.7} parent=0 // pred_check
    _
  $region15: #{graphsage_forward.7} parent=0 // pred_check_branch
    %34 = sbr.rel (0) target = $region17
  $region16: #{graphsage_forward.7} parent=0 // pred_region
    _
  $region17: #{graphsage_forward.7} parent=0 // pred_fallthru
    _
  // Predicated region
  $region18: #{graphsage_forward.7} parent=0 // pred_check
    _
  $region19: #{graphsage_forward.7} parent=0 // pred_check_branch
    %36 = sbr.rel (0) target = $region21
  $region20: #{graphsage_forward.7} parent=0 // pred_region
    _
  $region21: #{graphsage_forward.7} parent=0 // pred_fallthru
    _
  // Predicated region
  $region22: #{graphsage_forward.7} parent=0 // pred_check
    _
  $region23: #{graphsage_forward.7} parent=0 // pred_check_branch
    %38 = sbr.rel (0) target = $region25
  $region24: #{graphsage_forward.7} parent=0 // pred_region
    _
  $region25: #{graphsage_forward.7} parent=0 // pred_fallthru
    _
  %s39 = sadd.s32 0, 0
  %s40 = smul.u32 %s39, 128
  %s41 = sadd.s32 %s40, 0
  %s42 = sld [smem:[#allocation4 + %s41]]
  %p43 = scmp.lt.s32.totalorder %s42, 0
  %s44 = scalar_select %p43, %s42, 0
  %s45 = smul.addr %s44, 4
  %s46 = scalar_lea.vmem %s2, %s45
  %s47 = sadd.s32 0, 0
  %s48 = smul.u32 %s47, 128
  %s49 = sadd.s32 %s48, 0
  %s50 = sld [smem:[#allocation4 + %s49]]
  %p51 = scmp.lt.s32.totalorder %s50, 0
  %s52 = scalar_select %p51, %s50, 0
  %s53 = smul.addr %s52, 4
  %s54 = scalar_lea.vmem %s2, %s53
  %s55 = sadd.s32 0, 0
  %s56 = smul.u32 %s55, 128
  %s57 = sadd.s32 %s56, 0
  %s58 = sld [smem:[#allocation4 + %s57]]
  %p60 = scmp.eq.s32.totalorder 0, 0
  // Predicated region
  $region26: #{graphsage_forward.7} parent=0 // pred_check
    %p61 = pneg %p60
  $region27: #{graphsage_forward.7} parent=0 // pred_check_branch
    %63 = sbr.rel (%p61) target = $region29
  $region28: #{graphsage_forward.7} parent=0 // pred_region
    %64 = vst [vmem:[#allocation2] sm:$0xff] 0.0
    %65 = vst [vmem:[#allocation2 + $0x8] sm:$0xff] 0.0
    %66 = vst [vmem:[#allocation2 + $0x10] sm:$0xff] 0.0
    %67 = vst [vmem:[#allocation2 + $0x18] sm:$0xff] 0.0
    %68 = vst [vmem:[#allocation2 + $0x20] sm:$0xff] 0.0
    %69 = vst [vmem:[#allocation2 + $0x28] sm:$0xff] 0.0
    %70 = vst [vmem:[#allocation2 + $0x30] sm:$0xff] 0.0
    %71 = vst [vmem:[#allocation2 + $0x38] sm:$0xff] 0.0
    %72 = vst [vmem:[#allocation2 + $0x40] sm:$0xff] 0.0
    %73 = vst [vmem:[#allocation2 + $0x48] sm:$0xff] 0.0
    %74 = vst [vmem:[#allocation2 + $0x50] sm:$0xff] 0.0
    %75 = vst [vmem:[#allocation2 + $0x58] sm:$0xff] 0.0
    %76 = vst [vmem:[#allocation2 + $0x60] sm:$0xff] 0.0
    %77 = vst [vmem:[#allocation2 + $0x68] sm:$0xff] 0.0
    %78 = vst [vmem:[#allocation2 + $0x70] sm:$0xff] 0.0
    %79 = vst [vmem:[#allocation2 + $0x78] sm:$0xff] 0.0
  $region29: #{graphsage_forward.7} parent=0 // pred_fallthru
    _
  %s80 = sld [smem:[#allocation5]]
  %p81 = scmp.lt.s32.totalorder 0, %s80
  // Predicated region
  $region30: #{graphsage_forward.7} parent=0 // pred_check
    %p82 = pneg %p81
  $region31: #{graphsage_forward.7} parent=0 // pred_check_branch
    %84 = sbr.rel (%p82) target = $region33
  $region32: #{graphsage_forward.7} parent=0 // pred_region
    %s85 = sadd.s32 0, 0
    %s86 = smul.u32 %s85, 128
    %s87 = sadd.s32 %s86, 0
    %s88 = sld [smem:[#allocation4 + %s87]]
    %s89 = smul.u32 %s88, 128
    %s90 = sshra.s32 %s89, 3
    %s91 = sand.u32 %s89, 7
    %s92 = smul.addr %s90, 4
    %s93 = scalar_lea.vmem %s3, %s92
    %v94 = vld [vmem:[%s93] sm:$0xf]
    %v95 = vld [vmem:[%s93 + $0x4] sm:$0xf]
    %v96 = vld [vmem:[%s93 + $0x8] sm:$0xf]
    %v97 = vld [vmem:[%s93 + $0xc] sm:$0xf]
    %v98 = vld [vmem:[%s93 + $0x10] sm:$0xf]
    %v99 = vld [vmem:[%s93 + $0x14] sm:$0xf]
    %v100 = vld [vmem:[%s93 + $0x18] sm:$0xf]
    %v101 = vld [vmem:[%s93 + $0x1c] sm:$0xf]
    %v102 = vld [vmem:[%s93 + $0x20] sm:$0xf]
    %v103 = vld [vmem:[%s93 + $0x24] sm:$0xf]
    %v104 = vld [vmem:[%s93 + $0x28] sm:$0xf]
    %v105 = vld [vmem:[%s93 + $0x2c] sm:$0xf]
    %v106 = vld [vmem:[%s93 + $0x30] sm:$0xf]
    %v107 = vld [vmem:[%s93 + $0x34] sm:$0xf]
    %v108 = vld [vmem:[%s93 + $0x38] sm:$0xf]
    %v109 = vld [vmem:[%s93 + $0x3c] sm:$0xf]
    %v110 = vld [vmem:[#allocation2] sm:$0xff]
    %v111 = vld [vmem:[#allocation2 + $0x8] sm:$0xff]
    %v112 = vld [vmem:[#allocation2 + $0x10] sm:$0xff]
    %v113 = vld [vmem:[#allocation2 + $0x18] sm:$0xff]
    %v114 = vld [vmem:[#allocation2 + $0x20] sm:$0xff]
    %v115 = vld [vmem:[#allocation2 + $0x28] sm:$0xff]
    %v116 = vld [vmem:[#allocation2 + $0x30] sm:$0xff]
    %v117 = vld [vmem:[#allocation2 + $0x38] sm:$0xff]
    %v118 = vld [vmem:[#allocation2 + $0x40] sm:$0xff]
    %v119 = vld [vmem:[#allocation2 + $0x48] sm:$0xff]
    %v120 = vld [vmem:[#allocation2 + $0x50] sm:$0xff]
    %v121 = vld [vmem:[#allocation2 + $0x58] sm:$0xff]
    %v122 = vld [vmem:[#allocation2 + $0x60] sm:$0xff]
    %v123 = vld [vmem:[#allocation2 + $0x68] sm:$0xff]
    %v124 = vld [vmem:[#allocation2 + $0x70] sm:$0xff]
    %v125 = vld [vmem:[#allocation2 + $0x78] sm:$0xff]
    %v126 = vld [vmem:[%s54] sm:$0xf]
    %v127 = vld [vmem:[%s54 + $0x4] sm:$0xf]
    %v128 = vld [vmem:[%s54 + $0x8] sm:$0xf]
    %v129 = vld [vmem:[%s54 + $0xc] sm:$0xf]
    %v130 = vld [vmem:[%s54 + $0x10] sm:$0xf]
    %v131 = vld [vmem:[%s54 + $0x14] sm:$0xf]
    %v132 = vld [vmem:[%s54 + $0x18] sm:$0xf]
    %v133 = vld [vmem:[%s54 + $0x1c] sm:$0xf]
    %v134 = vld [vmem:[%s54 + $0x20] sm:$0xf]
    %v135 = vld [vmem:[%s54 + $0x24] sm:$0xf]
    %v136 = vld [vmem:[%s54 + $0x28] sm:$0xf]
    %v137 = vld [vmem:[%s54 + $0x2c] sm:$0xf]
    %v138 = vld [vmem:[%s54 + $0x30] sm:$0xf]
    %v139 = vld [vmem:[%s54 + $0x34] sm:$0xf]
    %v140 = vld [vmem:[%s54 + $0x38] sm:$0xf]
    %v141 = vld [vmem:[%s54 + $0x3c] sm:$0xf]
    %v158 = vunpack.c.l.b16 %v126
    %v159 = vunpack.c.l.b16 %v127
    %v160 = vunpack.c.l.b16 %v128
    %v161 = vunpack.c.l.b16 %v129
    %v162 = vunpack.c.l.b16 %v130
    %v163 = vunpack.c.l.b16 %v131
    %v164 = vunpack.c.l.b16 %v132
    %v165 = vunpack.c.l.b16 %v133
    %v166 = vunpack.c.l.b16 %v134
    %v167 = vunpack.c.l.b16 %v135
    %v168 = vunpack.c.l.b16 %v136
    %v169 = vunpack.c.l.b16 %v137
    %v170 = vunpack.c.l.b16 %v138
    %v171 = vunpack.c.l.b16 %v139
    %v172 = vunpack.c.l.b16 %v140
    %v173 = vunpack.c.l.b16 %v141
    %v174 = vpack.c.b16 %v159, %v158
    %v175 = vpack.c.b16 %v161, %v160
    %v176 = vpack.c.b16 %v163, %v162
    %v177 = vpack.c.b16 %v165, %v164
    %v178 = vpack.c.b16 %v167, %v166
    %v179 = vpack.c.b16 %v169, %v168
    %v180 = vpack.c.b16 %v171, %v170
    %v181 = vpack.c.b16 %v173, %v172
    %v206 = vunpack.c.l.b16 %v94
    %v207 = vunpack.c.l.b16 %v95
    %v208 = vunpack.c.l.b16 %v96
    %v209 = vunpack.c.l.b16 %v97
    %v210 = vunpack.c.l.b16 %v98
    %v211 = vunpack.c.l.b16 %v99
    %v212 = vunpack.c.l.b16 %v100
    %v213 = vunpack.c.l.b16 %v101
    %v214 = vunpack.c.l.b16 %v102
    %v215 = vunpack.c.l.b16 %v103
    %v216 = vunpack.c.l.b16 %v104
    %v217 = vunpack.c.l.b16 %v105
    %v218 = vunpack.c.l.b16 %v106
    %v219 = vunpack.c.l.b16 %v107
    %v220 = vunpack.c.l.b16 %v108
    %v221 = vunpack.c.l.b16 %v109
    %v222 = vpack.c.b16 %v207, %v206
    %v223 = vpack.c.b16 %v209, %v208
    %v224 = vpack.c.b16 %v211, %v210
    %v225 = vpack.c.b16 %v213, %v212
    %v226 = vpack.c.b16 %v215, %v214
    %v227 = vpack.c.b16 %v217, %v216
    %v228 = vpack.c.b16 %v219, %v218
    %v229 = vpack.c.b16 %v221, %v220
    %238 = vmatprep.subr.bf16.mxu0 0
    %239 = vmatpush1.bf16.msra.mxu0 %v222
    %240 = vmatprep.subr.bf16.mxu0 0
    %241 = vmatpush1.bf16.msra.mxu0 %v223
    %242 = vmatprep.subr.bf16.mxu0 0
    %243 = vmatpush1.bf16.msra.mxu0 %v224
    %244 = vmatprep.subr.bf16.mxu0 0
    %245 = vmatpush1.bf16.msra.mxu0 %v225
    %246 = vmatprep.subr.bf16.mxu0 0
    %247 = vmatpush1.bf16.msra.mxu0 %v226
    %248 = vmatprep.subr.bf16.mxu0 0
    %249 = vmatpush1.bf16.msra.mxu0 %v227
    %250 = vmatprep.subr.bf16.mxu0 0
    %251 = vmatpush1.bf16.msra.mxu0 %v228
    %252 = vmatprep.subr.bf16.mxu0 0
    %253 = vmatpush1.bf16.msra.mxu0 %v229
    %254 = vmatprep.subr.bf16.mxu0 0
    %255 = vmatpush1.bf16.msra.mxu0 0
    %256 = vmatprep.subr.bf16.mxu0 0
    %257 = vmatpush1.bf16.msra.mxu0 0
    %258 = vmatprep.subr.bf16.mxu0 0
    %259 = vmatpush1.bf16.msra.mxu0 0
    %260 = vmatprep.subr.bf16.mxu0 0
    %261 = vmatpush1.bf16.msra.mxu0 0
    %262 = vmatprep.subr.bf16.mxu0 0
    %263 = vmatpush1.bf16.msra.mxu0 0
    %264 = vmatprep.subr.bf16.mxu0 0
    %265 = vmatpush1.bf16.msra.mxu0 0
    %266 = vmatprep.subr.bf16.mxu0 0
    %267 = vmatpush1.bf16.msra.mxu0 0
    %268 = vmatprep.subr.bf16.mxu0 0
    %269 = vmatpush1.bf16.msra.mxu0 0
    %270 = vmatprep.mubr.bf16.mxu0 0
    %271 = vmatmul.mubr.bf16.gmra.mrb[0].mxu0 %v174
    %v272 = vpop.f32.mrb[0].mxu0
    %v273 = vadd.f32 0.0, %v272
    %v274 = vpop.f32.mrb[0].mxu0
    %v275 = vpop.f32.mrb[0].mxu0
    %v276 = vadd.f32 0.0, %v275
    %v277 = vpop.f32.mrb[0].mxu0
    %278 = vmatprep.mubr.bf16.mxu0 0
    %279 = vmatmul.mubr.bf16.gmra.mrb[0].mxu0 %v175
    %v280 = vpop.f32.mrb[0].mxu0
    %v281 = vadd.f32 0.0, %v280
    %v282 = vpop.f32.mrb[0].mxu0
    %v283 = vpop.f32.mrb[0].mxu0
    %v284 = vadd.f32 0.0, %v283
    %v285 = vpop.f32.mrb[0].mxu0
    %286 = vmatprep.mubr.bf16.mxu0 0
    %287 = vmatmul.mubr.bf16.gmra.mrb[0].mxu0 %v176
    %v288 = vpop.f32.mrb[0].mxu0
    %v289 = vadd.f32 0.0, %v288
    %v290 = vpop.f32.mrb[0].mxu0
    %v291 = vpop.f32.mrb[0].mxu0
    %v292 = vadd.f32 0.0, %v291
    %v293 = vpop.f32.mrb[0].mxu0
    %294 = vmatprep.mubr.bf16.mxu0 0
    %295 = vmatmul.mubr.bf16.gmra.mrb[0].mxu0 %v177
    %v296 = vpop.f32.mrb[0].mxu0
    %v297 = vadd.f32 0.0, %v296
    %v298 = vpop.f32.mrb[0].mxu0
    %v299 = vpop.f32.mrb[0].mxu0
    %v300 = vadd.f32 0.0, %v299
    %v301 = vpop.f32.mrb[0].mxu0
    %302 = vmatprep.mubr.bf16.mxu0 0
    %303 = vmatmul.mubr.bf16.gmra.mrb[0].mxu0 %v178
    %v304 = vpop.f32.mrb[0].mxu0
    %v305 = vadd.f32 0.0, %v304
    %v306 = vpop.f32.mrb[0].mxu0
    %v307 = vpop.f32.mrb[0].mxu0
    %v308 = vadd.f32 0.0, %v307
    %v309 = vpop.f32.mrb[0].mxu0
    %310 = vmatprep.mubr.bf16.mxu0 0
    %311 = vmatmul.mubr.bf16.gmra.mrb[0].mxu0 %v179
    %v312 = vpop.f32.mrb[0].mxu0
    %v313 = vadd.f32 0.0, %v312
    %v314 = vpop.f32.mrb[0].mxu0
    %v315 = vpop.f32.mrb[0].mxu0
    %v316 = vadd.f32 0.0, %v315
    %v317 = vpop.f32.mrb[0].mxu0
    %318 = vmatprep.mubr.bf16.mxu0 0
    %319 = vmatmul.mubr.bf16.gmra.mrb[0].mxu0 %v180
    %v320 = vpop.f32.mrb[0].mxu0
    %v321 = vadd.f32 0.0, %v320
    %v322 = vpop.f32.mrb[0].mxu0
    %v323 = vpop.f32.mrb[0].mxu0
    %v324 = vadd.f32 0.0, %v323
    %v325 = vpop.f32.mrb[0].mxu0
    %326 = vmatprep.mubr.bf16.mxu0 0
    %327 = vmatmul.mubr.bf16.gmra.mrb[0].mxu0 %v181
    %v328 = vpop.f32.mrb[0].mxu0
    %v329 = vadd.f32 0.0, %v328
    %v330 = vpop.f32.mrb[0].mxu0
    %v331 = vpop.f32.mrb[0].mxu0
    %v332 = vadd.f32 0.0, %v331
    %v333 = vpop.f32.mrb[0].mxu0
    %334 = vdwg.mxu0
    %v335 = vadd.f32 %v110, %v273
    %v336 = vadd.f32 %v111, %v276
    %v337 = vadd.f32 %v112, %v281
    %v338 = vadd.f32 %v113, %v284
    %v339 = vadd.f32 %v114, %v289
    %v340 = vadd.f32 %v115, %v292
    %v341 = vadd.f32 %v116, %v297
    %v342 = vadd.f32 %v117, %v300
    %v343 = vadd.f32 %v118, %v305
    %v344 = vadd.f32 %v119, %v308
    %v345 = vadd.f32 %v120, %v313
    %v346 = vadd.f32 %v121, %v316
    %v347 = vadd.f32 %v122, %v321
    %v348 = vadd.f32 %v123, %v324
    %v349 = vadd.f32 %v124, %v329
    %v350 = vadd.f32 %v125, %v332
    %351 = vst [vmem:[#allocation2] sm:$0xff] %v335
    %352 = vst [vmem:[#allocation2 + $0x8] sm:$0xff] %v336
    %353 = vst [vmem:[#allocation2 + $0x10] sm:$0xff] %v337
    %354 = vst [vmem:[#allocation2 + $0x18] sm:$0xff] %v338
    %355 = vst [vmem:[#allocation2 + $0x20] sm:$0xff] %v339
    %356 = vst [vmem:[#allocation2 + $0x28] sm:$0xff] %v340
    %357 = vst [vmem:[#allocation2 + $0x30] sm:$0xff] %v341
    %358 = vst [vmem:[#allocation2 + $0x38] sm:$0xff] %v342
    %359 = vst [vmem:[#allocation2 + $0x40] sm:$0xff] %v343
    %360 = vst [vmem:[#allocation2 + $0x48] sm:$0xff] %v344
    %361 = vst [vmem:[#allocation2 + $0x50] sm:$0xff] %v345
    %362 = vst [vmem:[#allocation2 + $0x58] sm:$0xff] %v346
    %363 = vst [vmem:[#allocation2 + $0x60] sm:$0xff] %v347
    %364 = vst [vmem:[#allocation2 + $0x68] sm:$0xff] %v348
    %365 = vst [vmem:[#allocation2 + $0x70] sm:$0xff] %v349
    %366 = vst [vmem:[#allocation2 + $0x78] sm:$0xff] %v350
  $region33: #{graphsage_forward.7} parent=0 // pred_fallthru
    _
  // Predicated region
  $region34: #{graphsage_forward.7} parent=0 // pred_check
    %p367 = pneg %p60
  $region35: #{graphsage_forward.7} parent=0 // pred_check_branch
    %369 = sbr.rel (%p367) target = $region37
  $region36: #{graphsage_forward.7} parent=0 // pred_region
    %v370 = vld [vmem:[%s4] sm:$0xf]
    %v371 = vld [vmem:[%s4 + $0x4] sm:$0xf]
    %v372 = vld [vmem:[%s4 + $0x8] sm:$0xf]
    %v373 = vld [vmem:[%s4 + $0xc] sm:$0xf]
    %v374 = vld [vmem:[%s4 + $0x10] sm:$0xf]
    %v375 = vld [vmem:[%s4 + $0x14] sm:$0xf]
    %v376 = vld [vmem:[%s4 + $0x18] sm:$0xf]
    %v377 = vld [vmem:[%s4 + $0x1c] sm:$0xf]
    %v378 = vld [vmem:[%s4 + $0x20] sm:$0xf]
    %v379 = vld [vmem:[%s4 + $0x24] sm:$0xf]
    %v380 = vld [vmem:[%s4 + $0x28] sm:$0xf]
    %v381 = vld [vmem:[%s4 + $0x2c] sm:$0xf]
    %v382 = vld [vmem:[%s4 + $0x30] sm:$0xf]
    %v383 = vld [vmem:[%s4 + $0x34] sm:$0xf]
    %v384 = vld [vmem:[%s4 + $0x38] sm:$0xf]
    %v385 = vld [vmem:[%s4 + $0x3c] sm:$0xf]
    %v386 = vld [vmem:[%s5] sm:$0xf]
    %v387 = vld [vmem:[%s5 + $0x4] sm:$0xf]
    %v388 = vld [vmem:[%s5 + $0x8] sm:$0xf]
    %v389 = vld [vmem:[%s5 + $0xc] sm:$0xf]
    %v390 = vld [vmem:[%s5 + $0x10] sm:$0xf]
    %v391 = vld [vmem:[%s5 + $0x14] sm:$0xf]
    %v392 = vld [vmem:[%s5 + $0x18] sm:$0xf]
    %v393 = vld [vmem:[%s5 + $0x1c] sm:$0xf]
    %v394 = vld [vmem:[%s5 + $0x20] sm:$0xf]
    %v395 = vld [vmem:[%s5 + $0x24] sm:$0xf]
    %v396 = vld [vmem:[%s5 + $0x28] sm:$0xf]
    %v397 = vld [vmem:[%s5 + $0x2c] sm:$0xf]
    %v398 = vld [vmem:[%s5 + $0x30] sm:$0xf]
    %v399 = vld [vmem:[%s5 + $0x34] sm:$0xf]
    %v400 = vld [vmem:[%s5 + $0x38] sm:$0xf]
    %v401 = vld [vmem:[%s5 + $0x3c] sm:$0xf]
    %v402 = vld [vmem:[%s6] sm:$0x1]
    %v404 = vlaneseq
    %v405 = vshrl.u32 %v404, 7
    %v406 = vsub.s32 0, %v405
    %v407 = vrot.slane %v402, %v406
    %v425 = vunpack.c.l.b16 %v370
    %v426 = vunpack.c.l.b16 %v371
    %v427 = vunpack.c.l.b16 %v372
    %v428 = vunpack.c.l.b16 %v373
    %v429 = vunpack.c.l.b16 %v374
    %v430 = vunpack.c.l.b16 %v375
    %v431 = vunpack.c.l.b16 %v376
    %v432 = vunpack.c.l.b16 %v377
    %v433 = vunpack.c.l.b16 %v378
    %v434 = vunpack.c.l.b16 %v379
    %v435 = vunpack.c.l.b16 %v380
    %v436 = vunpack.c.l.b16 %v381
    %v437 = vunpack.c.l.b16 %v382
    %v438 = vunpack.c.l.b16 %v383
    %v439 = vunpack.c.l.b16 %v384
    %v440 = vunpack.c.l.b16 %v385
    %v441 = vpack.c.b16 %v426, %v425
    %v442 = vpack.c.b16 %v428, %v427
    %v443 = vpack.c.b16 %v430, %v429
    %v444 = vpack.c.b16 %v432, %v431
    %v445 = vpack.c.b16 %v434, %v433
    %v446 = vpack.c.b16 %v436, %v435
    %v447 = vpack.c.b16 %v438, %v437
    %v448 = vpack.c.b16 %v440, %v439
    %v473 = vunpack.c.l.b16 %v386
    %v474 = vunpack.c.l.b16 %v387
    %v475 = vunpack.c.l.b16 %v388
    %v476 = vunpack.c.l.b16 %v389
    %v477 = vunpack.c.l.b16 %v390
    %v478 = vunpack.c.l.b16 %v391
    %v479 = vunpack.c.l.b16 %v392
    %v480 = vunpack.c.l.b16 %v393
    %v481 = vunpack.c.l.b16 %v394
    %v482 = vunpack.c.l.b16 %v395
    %v483 = vunpack.c.l.b16 %v396
    %v484 = vunpack.c.l.b16 %v397
    %v485 = vunpack.c.l.b16 %v398
    %v486 = vunpack.c.l.b16 %v399
    %v487 = vunpack.c.l.b16 %v400
    %v488 = vunpack.c.l.b16 %v401
    %v489 = vpack.c.b16 %v474, %v473
    %v490 = vpack.c.b16 %v476, %v475
    %v491 = vpack.c.b16 %v478, %v477
    %v492 = vpack.c.b16 %v480, %v479
    %v493 = vpack.c.b16 %v482, %v481
    %v494 = vpack.c.b16 %v484, %v483
    %v495 = vpack.c.b16 %v486, %v485
    %v496 = vpack.c.b16 %v488, %v487
    %505 = vmatprep.subr.bf16.mxu0 0
    %506 = vmatpush1.bf16.msra.mxu0 %v489
    %507 = vmatprep.subr.bf16.mxu0 0
    %508 = vmatpush1.bf16.msra.mxu0 %v490
    %509 = vmatprep.subr.bf16.mxu0 0
    %510 = vmatpush1.bf16.msra.mxu0 %v491
    %511 = vmatprep.subr.bf16.mxu0 0
    %512 = vmatpush1.bf16.msra.mxu0 %v492
    %513 = vmatprep.subr.bf16.mxu0 0
    %514 = vmatpush1.bf16.msra.mxu0 %v493
    %515 = vmatprep.subr.bf16.mxu0 0
    %516 = vmatpush1.bf16.msra.mxu0 %v494
    %517 = vmatprep.subr.bf16.mxu0 0
    %518 = vmatpush1.bf16.msra.mxu0 %v495
    %519 = vmatprep.subr.bf16.mxu0 0
    %520 = vmatpush1.bf16.msra.mxu0 %v496
    %521 = vmatprep.subr.bf16.mxu0 0
    %522 = vmatpush1.bf16.msra.mxu0 0
    %523 = vmatprep.subr.bf16.mxu0 0
    %524 = vmatpush1.bf16.msra.mxu0 0
    %525 = vmatprep.subr.bf16.mxu0 0
    %526 = vmatpush1.bf16.msra.mxu0 0
    %527 = vmatprep.subr.bf16.mxu0 0
    %528 = vmatpush1.bf16.msra.mxu0 0
    %529 = vmatprep.subr.bf16.mxu0 0
    %530 = vmatpush1.bf16.msra.mxu0 0
    %531 = vmatprep.subr.bf16.mxu0 0
    %532 = vmatpush1.bf16.msra.mxu0 0
    %533 = vmatprep.subr.bf16.mxu0 0
    %534 = vmatpush1.bf16.msra.mxu0 0
    %535 = vmatprep.subr.bf16.mxu0 0
    %536 = vmatpush1.bf16.msra.mxu0 0
    %537 = vmatprep.mubr.bf16.mxu0 0
    %538 = vmatmul.mubr.bf16.gmra.mrb[0].mxu0 %v441
    %v539 = vpop.f32.mrb[0].mxu0
    %v540 = vadd.f32 %v407, %v539
    %v541 = vpop.f32.mrb[0].mxu0
    %v542 = vpop.f32.mrb[0].mxu0
    %v543 = vadd.f32 %v407, %v542
    %v544 = vpop.f32.mrb[0].mxu0
    %545 = vmatprep.mubr.bf16.mxu0 0
    %546 = vmatmul.mubr.bf16.gmra.mrb[0].mxu0 %v442
    %v547 = vpop.f32.mrb[0].mxu0
    %v548 = vadd.f32 %v407, %v547
    %v549 = vpop.f32.mrb[0].mxu0
    %v550 = vpop.f32.mrb[0].mxu0
    %v551 = vadd.f32 %v407, %v550
    %v552 = vpop.f32.mrb[0].mxu0
    %553 = vmatprep.mubr.bf16.mxu0 0
    %554 = vmatmul.mubr.bf16.gmra.mrb[0].mxu0 %v443
    %v555 = vpop.f32.mrb[0].mxu0
    %v556 = vadd.f32 %v407, %v555
    %v557 = vpop.f32.mrb[0].mxu0
    %v558 = vpop.f32.mrb[0].mxu0
    %v559 = vadd.f32 %v407, %v558
    %v560 = vpop.f32.mrb[0].mxu0
    %561 = vmatprep.mubr.bf16.mxu0 0
    %562 = vmatmul.mubr.bf16.gmra.mrb[0].mxu0 %v444
    %v563 = vpop.f32.mrb[0].mxu0
    %v564 = vadd.f32 %v407, %v563
    %v565 = vpop.f32.mrb[0].mxu0
    %v566 = vpop.f32.mrb[0].mxu0
    %v567 = vadd.f32 %v407, %v566
    %v568 = vpop.f32.mrb[0].mxu0
    %569 = vmatprep.mubr.bf16.mxu0 0
    %570 = vmatmul.mubr.bf16.gmra.mrb[0].mxu0 %v445
    %v571 = vpop.f32.mrb[0].mxu0
    %v572 = vadd.f32 %v407, %v571
    %v573 = vpop.f32.mrb[0].mxu0
    %v574 = vpop.f32.mrb[0].mxu0
    %v575 = vadd.f32 %v407, %v574
    %v576 = vpop.f32.mrb[0].mxu0
    %577 = vmatprep.mubr.bf16.mxu0 0
    %578 = vmatmul.mubr.bf16.gmra.mrb[0].mxu0 %v446
    %v579 = vpop.f32.mrb[0].mxu0
    %v580 = vadd.f32 %v407, %v579
    %v581 = vpop.f32.mrb[0].mxu0
    %v582 = vpop.f32.mrb[0].mxu0
    %v583 = vadd.f32 %v407, %v582
    %v584 = vpop.f32.mrb[0].mxu0
    %585 = vmatprep.mubr.bf16.mxu0 0
    %586 = vmatmul.mubr.bf16.gmra.mrb[0].mxu0 %v447
    %v587 = vpop.f32.mrb[0].mxu0
    %v588 = vadd.f32 %v407, %v587
    %v589 = vpop.f32.mrb[0].mxu0
    %v590 = vpop.f32.mrb[0].mxu0
    %v591 = vadd.f32 %v407, %v590
    %v592 = vpop.f32.mrb[0].mxu0
    %593 = vmatprep.mubr.bf16.mxu0 0
    %594 = vmatmul.mubr.bf16.gmra.mrb[0].mxu0 %v448
    %v595 = vpop.f32.mrb[0].mxu0
    %v596 = vadd.f32 %v407, %v595
    %v597 = vpop.f32.mrb[0].mxu0
    %v598 = vpop.f32.mrb[0].mxu0
    %v599 = vadd.f32 %v407, %v598
    %v600 = vpop.f32.mrb[0].mxu0
    %601 = vdwg.mxu0
    %v602 = vld [vmem:[#allocation2] sm:$0xff]
    %v603 = vld [vmem:[#allocation2 + $0x8] sm:$0xff]
    %v604 = vld [vmem:[#allocation2 + $0x10] sm:$0xff]
    %v605 = vld [vmem:[#allocation2 + $0x18] sm:$0xff]
    %v606 = vld [vmem:[#allocation2 + $0x20] sm:$0xff]
    %v607 = vld [vmem:[#allocation2 + $0x28] sm:$0xff]
    %v608 = vld [vmem:[#allocation2 + $0x30] sm:$0xff]
    %v609 = vld [vmem:[#allocation2 + $0x38] sm:$0xff]
    %v610 = vld [vmem:[#allocation2 + $0x40] sm:$0xff]
    %v611 = vld [vmem:[#allocation2 + $0x48] sm:$0xff]
    %v612 = vld [vmem:[#allocation2 + $0x50] sm:$0xff]
    %v613 = vld [vmem:[#allocation2 + $0x58] sm:$0xff]
    %v614 = vld [vmem:[#allocation2 + $0x60] sm:$0xff]
    %v615 = vld [vmem:[#allocation2 + $0x68] sm:$0xff]
    %v616 = vld [vmem:[#allocation2 + $0x70] sm:$0xff]
    %v617 = vld [vmem:[#allocation2 + $0x78] sm:$0xff]
    %v618 = vld [vmem:[%s7] sm:$0xff]
    %v619 = vld [vmem:[%s7 + $0x8] sm:$0xff]
    %v620 = vld [vmem:[%s7 + $0x10] sm:$0xff]
    %v621 = vld [vmem:[%s7 + $0x18] sm:$0xff]
    %v622 = vld [vmem:[%s7 + $0x20] sm:$0xff]
    %v623 = vld [vmem:[%s7 + $0x28] sm:$0xff]
    %v624 = vld [vmem:[%s7 + $0x30] sm:$0xff]
    %v625 = vld [vmem:[%s7 + $0x38] sm:$0xff]
    %v626 = vld [vmem:[%s7 + $0x40] sm:$0xff]
    %v627 = vld [vmem:[%s7 + $0x48] sm:$0xff]
    %v628 = vld [vmem:[%s7 + $0x50] sm:$0xff]
    %v629 = vld [vmem:[%s7 + $0x58] sm:$0xff]
    %v630 = vld [vmem:[%s7 + $0x60] sm:$0xff]
    %v631 = vld [vmem:[%s7 + $0x68] sm:$0xff]
    %v632 = vld [vmem:[%s7 + $0x70] sm:$0xff]
    %v633 = vld [vmem:[%s7 + $0x78] sm:$0xff]
    %635 = vset.pattern.permute.xlu0 0
    %636 = vperm.xlu0 %635, %v618
    %v637 = vpop.permute.xlu0 %636
    %640 = vset.pattern.permute.xlu0 0
    %641 = vperm.xlu0 %640, %v619
    %v642 = vpop.permute.xlu0 %641
    %645 = vset.pattern.permute.xlu0 0
    %646 = vperm.xlu0 %645, %v620
    %v647 = vpop.permute.xlu0 %646
    %650 = vset.pattern.permute.xlu0 0
    %651 = vperm.xlu0 %650, %v621
    %v652 = vpop.permute.xlu0 %651
    %655 = vset.pattern.permute.xlu0 0
    %656 = vperm.xlu0 %655, %v622
    %v657 = vpop.permute.xlu0 %656
    %660 = vset.pattern.permute.xlu0 0
    %661 = vperm.xlu0 %660, %v623
    %v662 = vpop.permute.xlu0 %661
    %665 = vset.pattern.permute.xlu0 0
    %666 = vperm.xlu0 %665, %v624
    %v667 = vpop.permute.xlu0 %666
    %670 = vset.pattern.permute.xlu0 0
    %671 = vperm.xlu0 %670, %v625
    %v672 = vpop.permute.xlu0 %671
    %675 = vset.pattern.permute.xlu0 0
    %676 = vperm.xlu0 %675, %v626
    %v677 = vpop.permute.xlu0 %676
    %680 = vset.pattern.permute.xlu0 0
    %681 = vperm.xlu0 %680, %v627
    %v682 = vpop.permute.xlu0 %681
    %685 = vset.pattern.permute.xlu0 0
    %686 = vperm.xlu0 %685, %v628
    %v687 = vpop.permute.xlu0 %686
    %690 = vset.pattern.permute.xlu0 0
    %691 = vperm.xlu0 %690, %v629
    %v692 = vpop.permute.xlu0 %691
    %695 = vset.pattern.permute.xlu0 0
    %696 = vperm.xlu0 %695, %v630
    %v697 = vpop.permute.xlu0 %696
    %700 = vset.pattern.permute.xlu0 0
    %701 = vperm.xlu0 %700, %v631
    %v702 = vpop.permute.xlu0 %701
    %705 = vset.pattern.permute.xlu0 0
    %706 = vperm.xlu0 %705, %v632
    %v707 = vpop.permute.xlu0 %706
    %710 = vset.pattern.permute.xlu0 0
    %711 = vperm.xlu0 %710, %v633
    %v712 = vpop.permute.xlu0 %711
    %v714 = vmul.f32 %v602, %v637
    %v715 = vmul.f32 %v603, %v642
    %v716 = vmul.f32 %v604, %v647
    %v717 = vmul.f32 %v605, %v652
    %v718 = vmul.f32 %v606, %v657
    %v719 = vmul.f32 %v607, %v662
    %v720 = vmul.f32 %v608, %v667
    %v721 = vmul.f32 %v609, %v672
    %v722 = vmul.f32 %v610, %v677
    %v723 = vmul.f32 %v611, %v682
    %v724 = vmul.f32 %v612, %v687
    %v725 = vmul.f32 %v613, %v692
    %v726 = vmul.f32 %v614, %v697
    %v727 = vmul.f32 %v615, %v702
    %v728 = vmul.f32 %v616, %v707
    %v729 = vmul.f32 %v617, %v712
    %v730 = vadd.f32 %v714, %v540
    %v731 = vadd.f32 %v715, %v543
    %v732 = vadd.f32 %v716, %v548
    %v733 = vadd.f32 %v717, %v551
    %v734 = vadd.f32 %v718, %v556
    %v735 = vadd.f32 %v719, %v559
    %v736 = vadd.f32 %v720, %v564
    %v737 = vadd.f32 %v721, %v567
    %v738 = vadd.f32 %v722, %v572
    %v739 = vadd.f32 %v723, %v575
    %v740 = vadd.f32 %v724, %v580
    %v741 = vadd.f32 %v725, %v583
    %v742 = vadd.f32 %v726, %v588
    %v743 = vadd.f32 %v727, %v591
    %v744 = vadd.f32 %v728, %v596
    %v745 = vadd.f32 %v729, %v599
    %v746 = vlaneseq
    %v747 = vand.u32 %v746, 127
    %vm748 = vcmp.lt.s32.totalorder %v747, 4
    %v749 = vsel %vm748, %v730, -inf
    %v750 = vsel %vm748, %v731, -inf
    %v751 = vsel %vm748, %v732, -inf
    %v752 = vsel %vm748, %v733, -inf
    %v753 = vsel %vm748, %v734, -inf
    %v754 = vsel %vm748, %v735, -inf
    %v755 = vsel %vm748, %v736, -inf
    %v756 = vsel %vm748, %v737, -inf
    %v757 = vsel %vm748, %v738, -inf
    %v758 = vsel %vm748, %v739, -inf
    %v759 = vsel %vm748, %v740, -inf
    %v760 = vsel %vm748, %v741, -inf
    %v761 = vsel %vm748, %v742, -inf
    %v762 = vsel %vm748, %v743, -inf
    %v763 = vsel %vm748, %v744, -inf
    %v764 = vsel %vm748, %v745, -inf
    %765 = vmax.xlane.f32.xlu0 %v749
    %v766 = vpop.xlane.xlu0 %765
    %767 = vmax.xlane.f32.xlu0 %v750
    %v768 = vpop.xlane.xlu0 %767
    %769 = vmax.xlane.f32.xlu0 %v751
    %v770 = vpop.xlane.xlu0 %769
    %771 = vmax.xlane.f32.xlu0 %v752
    %v772 = vpop.xlane.xlu0 %771
    %773 = vmax.xlane.f32.xlu0 %v753
    %v774 = vpop.xlane.xlu0 %773
    %775 = vmax.xlane.f32.xlu0 %v754
    %v776 = vpop.xlane.xlu0 %775
    %777 = vmax.xlane.f32.xlu0 %v755
    %v778 = vpop.xlane.xlu0 %777
    %779 = vmax.xlane.f32.xlu0 %v756
    %v780 = vpop.xlane.xlu0 %779
    %781 = vmax.xlane.f32.xlu0 %v757
    %v782 = vpop.xlane.xlu0 %781
    %783 = vmax.xlane.f32.xlu0 %v758
    %v784 = vpop.xlane.xlu0 %783
    %785 = vmax.xlane.f32.xlu0 %v759
    %v786 = vpop.xlane.xlu0 %785
    %787 = vmax.xlane.f32.xlu0 %v760
    %v788 = vpop.xlane.xlu0 %787
    %789 = vmax.xlane.f32.xlu0 %v761
    %v790 = vpop.xlane.xlu0 %789
    %791 = vmax.xlane.f32.xlu0 %v762
    %v792 = vpop.xlane.xlu0 %791
    %793 = vmax.xlane.f32.xlu0 %v763
    %v794 = vpop.xlane.xlu0 %793
    %795 = vmax.xlane.f32.xlu0 %v764
    %v796 = vpop.xlane.xlu0 %795
    %v797 = vsub.f32 %v749, %v766
    %v798 = vsub.f32 %v750, %v768
    %v799 = vsub.f32 %v751, %v770
    %v800 = vsub.f32 %v752, %v772
    %v801 = vsub.f32 %v753, %v774
    %v802 = vsub.f32 %v754, %v776
    %v803 = vsub.f32 %v755, %v778
    %v804 = vsub.f32 %v756, %v780
    %v805 = vsub.f32 %v757, %v782
    %v806 = vsub.f32 %v758, %v784
    %v807 = vsub.f32 %v759, %v786
    %v808 = vsub.f32 %v760, %v788
    %v809 = vsub.f32 %v761, %v790
    %v810 = vsub.f32 %v762, %v792
    %v811 = vsub.f32 %v763, %v794
    %v812 = vsub.f32 %v764, %v796
    %v813 = vmul.f32 %v797, 1.442695
    %v814 = vpow.pop %v813
    %v815 = vmul.f32 %v798, 1.442695
    %v816 = vpow.pop %v815
    %v817 = vmul.f32 %v799, 1.442695
    %v818 = vpow.pop %v817
    %v819 = vmul.f32 %v800, 1.442695
    %v820 = vpow.pop %v819
    %v821 = vmul.f32 %v801, 1.442695
    %v822 = vpow.pop %v821
    %v823 = vmul.f32 %v802, 1.442695
    %v824 = vpow.pop %v823
    %v825 = vmul.f32 %v803, 1.442695
    %v826 = vpow.pop %v825
    %v827 = vmul.f32 %v804, 1.442695
    %v828 = vpow.pop %v827
    %v829 = vmul.f32 %v805, 1.442695
    %v830 = vpow.pop %v829
    %v831 = vmul.f32 %v806, 1.442695
    %v832 = vpow.pop %v831
    %v833 = vmul.f32 %v807, 1.442695
    %v834 = vpow.pop %v833
    %v835 = vmul.f32 %v808, 1.442695
    %v836 = vpow.pop %v835
    %v837 = vmul.f32 %v809, 1.442695
    %v838 = vpow.pop %v837
    %v839 = vmul.f32 %v810, 1.442695
    %v840 = vpow.pop %v839
    %v841 = vmul.f32 %v811, 1.442695
    %v842 = vpow.pop %v841
    %v843 = vmul.f32 %v812, 1.442695
    %v844 = vpow.pop %v843
    %845 = vadd.xlane.f32.xlu0 %v814
    %v846 = vpop.xlane.xlu0 %845
    %847 = vadd.xlane.f32.xlu0 %v816
    %v848 = vpop.xlane.xlu0 %847
    %849 = vadd.xlane.f32.xlu0 %v818
    %v850 = vpop.xlane.xlu0 %849
    %851 = vadd.xlane.f32.xlu0 %v820
    %v852 = vpop.xlane.xlu0 %851
    %853 = vadd.xlane.f32.xlu0 %v822
    %v854 = vpop.xlane.xlu0 %853
    %855 = vadd.xlane.f32.xlu0 %v824
    %v856 = vpop.xlane.xlu0 %855
    %857 = vadd.xlane.f32.xlu0 %v826
    %v858 = vpop.xlane.xlu0 %857
    %859 = vadd.xlane.f32.xlu0 %v828
    %v860 = vpop.xlane.xlu0 %859
    %861 = vadd.xlane.f32.xlu0 %v830
    %v862 = vpop.xlane.xlu0 %861
    %863 = vadd.xlane.f32.xlu0 %v832
    %v864 = vpop.xlane.xlu0 %863
    %865 = vadd.xlane.f32.xlu0 %v834
    %v866 = vpop.xlane.xlu0 %865
    %867 = vadd.xlane.f32.xlu0 %v836
    %v868 = vpop.xlane.xlu0 %867
    %869 = vadd.xlane.f32.xlu0 %v838
    %v870 = vpop.xlane.xlu0 %869
    %871 = vadd.xlane.f32.xlu0 %v840
    %v872 = vpop.xlane.xlu0 %871
    %873 = vadd.xlane.f32.xlu0 %v842
    %v874 = vpop.xlane.xlu0 %873
    %875 = vadd.xlane.f32.xlu0 %v844
    %v876 = vpop.xlane.xlu0 %875
    %v877 = vlog2.pop %v846
    %v878 = vmul.f32 %v877, 0.6931472
    %v879 = vlog2.pop %v848
    %v880 = vmul.f32 %v879, 0.6931472
    %v881 = vlog2.pop %v850
    %v882 = vmul.f32 %v881, 0.6931472
    %v883 = vlog2.pop %v852
    %v884 = vmul.f32 %v883, 0.6931472
    %v885 = vlog2.pop %v854
    %v886 = vmul.f32 %v885, 0.6931472
    %v887 = vlog2.pop %v856
    %v888 = vmul.f32 %v887, 0.6931472
    %v889 = vlog2.pop %v858
    %v890 = vmul.f32 %v889, 0.6931472
    %v891 = vlog2.pop %v860
    %v892 = vmul.f32 %v891, 0.6931472
    %v893 = vlog2.pop %v862
    %v894 = vmul.f32 %v893, 0.6931472
    %v895 = vlog2.pop %v864
    %v896 = vmul.f32 %v895, 0.6931472
    %v897 = vlog2.pop %v866
    %v898 = vmul.f32 %v897, 0.6931472
    %v899 = vlog2.pop %v868
    %v900 = vmul.f32 %v899, 0.6931472
    %v901 = vlog2.pop %v870
    %v902 = vmul.f32 %v901, 0.6931472
    %v903 = vlog2.pop %v872
    %v904 = vmul.f32 %v903, 0.6931472
    %v905 = vlog2.pop %v874
    %v906 = vmul.f32 %v905, 0.6931472
    %v907 = vlog2.pop %v876
    %v908 = vmul.f32 %v907, 0.6931472
    %v909 = vsub.f32 %v797, %v878
    %v910 = vsub.f32 %v798, %v880
    %v911 = vsub.f32 %v799, %v882
    %v912 = vsub.f32 %v800, %v884
    %v913 = vsub.f32 %v801, %v886
    %v914 = vsub.f32 %v802, %v888
    %v915 = vsub.f32 %v803, %v890
    %v916 = vsub.f32 %v804, %v892
    %v917 = vsub.f32 %v805, %v894
    %v918 = vsub.f32 %v806, %v896
    %v919 = vsub.f32 %v807, %v898
    %v920 = vsub.f32 %v808, %v900
    %v921 = vsub.f32 %v809, %v902
    %v922 = vsub.f32 %v810, %v904
    %v923 = vsub.f32 %v811, %v906
    %v924 = vsub.f32 %v812, %v908
    %925 = vst [vmem:[%s8] sm:$0xff] %v909
    %926 = vst [vmem:[%s8 + $0x8] sm:$0xff] %v910
    %927 = vst [vmem:[%s8 + $0x10] sm:$0xff] %v911
    %928 = vst [vmem:[%s8 + $0x18] sm:$0xff] %v912
    %929 = vst [vmem:[%s8 + $0x20] sm:$0xff] %v913
    %930 = vst [vmem:[%s8 + $0x28] sm:$0xff] %v914
    %931 = vst [vmem:[%s8 + $0x30] sm:$0xff] %v915
    %932 = vst [vmem:[%s8 + $0x38] sm:$0xff] %v916
    %933 = vst [vmem:[%s8 + $0x40] sm:$0xff] %v917
    %934 = vst [vmem:[%s8 + $0x48] sm:$0xff] %v918
    %935 = vst [vmem:[%s8 + $0x50] sm:$0xff] %v919
    %936 = vst [vmem:[%s8 + $0x58] sm:$0xff] %v920
    %937 = vst [vmem:[%s8 + $0x60] sm:$0xff] %v921
    %938 = vst [vmem:[%s8 + $0x68] sm:$0xff] %v922
    %939 = vst [vmem:[%s8 + $0x70] sm:$0xff] %v923
    %940 = vst [vmem:[%s8 + $0x78] sm:$0xff] %v924
  $region37: #{graphsage_forward.7} parent=0 // pred_fallthru
    _
  // Predicated region
  $region38: #{graphsage_forward.7} parent=0 // pred_check
    _
  $region39: #{graphsage_forward.7} parent=0 // pred_check_branch
    %942 = sbr.rel (0) target = $region41
  $region40: #{graphsage_forward.7} parent=0 // pred_region
    _
  $region41: #{graphsage_forward.7} parent=0 // pred_fallthru
    _
  // Predicated region
  $region42: #{graphsage_forward.7} parent=0 // pred_check
    _
  $region43: #{graphsage_forward.7} parent=0 // pred_check_branch
    %944 = sbr.rel (0) target = $region45
  $region44: #{graphsage_forward.7} parent=0 // pred_region
    _
  $region45: #{graphsage_forward.7} parent=0 // pred_fallthru
    _

// kernel: graphsage_forward.5
$region0: #{graphsage_forward.5}
  #allocation0 [shape = 'u32[]', space=smem, size = 0x4, offset = 0x4, fixed_abs, tag = 'smem constant byte address 0x4 - core index']
  #allocation1 [shape = 'u32[144,128]{1,0:T(1,128)}', space=vmem, size = 0x12000, scoped, tag = 'internal scratch']
  #allocation2 [shape = 'f32[128,128]{1,0:T(8,128)}', space=vmem, size = 0x10000, scoped, tag = 'scratch operand']
  #allocation3 [shape = 's32[1]{0}', space=sflag, size = 0x4, scoped, tag = 'scoped memory for graphsage_forward.5']
  #allocation4 [shape = 's32[1,1]{1,0:T(1,128)S(6)}', space=smem, size = 0x200, scoped, tag = 'prefetched SMEM operand 0']
  #allocation5 [shape = 's32[1]{0:T(128)S(6)}', space=smem, size = 0x200, scoped, tag = 'prefetched SMEM operand 1']
  %s0 = inlined_call_operand.<no memory space> [shape: s32[1,1], index: 0, kind: input, shape index: {}]
  %s1 = inlined_call_operand.<no memory space> [shape: s32[1], index: 1, kind: input, shape index: {}]
  %s2 = inlined_call_operand.vmem [shape: bf16[128,128], index: 2, kind: input, shape index: {}]
  %s3 = inlined_call_operand.vmem [shape: bf16[128,128], index: 3, kind: input, shape index: {}]
  %s4 = inlined_call_operand.vmem [shape: bf16[128,128], index: 4, kind: input, shape index: {}]
  %s5 = inlined_call_operand.vmem [shape: bf16[128,128], index: 5, kind: input, shape index: {}]
  %s6 = inlined_call_operand.vmem [shape: f32[1,128], index: 6, kind: input, shape index: {}]
  %s7 = inlined_call_operand.vmem [shape: f32[128,1], index: 7, kind: input, shape index: {}]
  %s8 = inlined_call_operand.vmem [shape: bf16[128,128], index: 8, kind: output, shape index: {}]
  %s9 = sld [smem:[#allocation0]]
  $region46: #{graphsage_forward.5} parent=0
    _
  %s11 = ssub.s32 1, %s9
  %s12 = scalar_select 0, %s11, %s9
  %13 = sst [smem:[#allocation4]] %s0
  %14 = sst [smem:[#allocation5]] %s1
  // Predicated region
  $region2: #{graphsage_forward.5} parent=0 // pred_check
    _
  $region3: #{graphsage_forward.5} parent=0 // pred_check_branch
    %16 = sbr.rel (0) target = $region5
  $region4: #{graphsage_forward.5} parent=0 // pred_region
    %s17 = sadd.s32 0, 0
    %s18 = smul.u32 %s17, 128
    %s19 = sadd.s32 %s18, 0
    %s20 = sld [smem:[#allocation4 + %s19]]
    %p21 = scmp.lt.s32.totalorder %s20, 0
    %s22 = scalar_select %p21, %s20, 0
    %s23 = smul.addr %s22, 4
    %s24 = scalar_lea.vmem %s2, %s23
    %s25 = sadd.s32 0, 0
    %s26 = smul.u32 %s25, 128
    %s27 = sadd.s32 %s26, 0
    %s28 = sld [smem:[#allocation4 + %s27]]
  $region5: #{graphsage_forward.5} parent=0 // pred_fallthru
    _
  // Predicated region
  $region6: #{graphsage_forward.5} parent=0 // pred_check
    _
  $region7: #{graphsage_forward.5} parent=0 // pred_check_branch
    %30 = sbr.rel (0) target = $region9
  $region8: #{graphsage_forward.5} parent=0 // pred_region
    _
  $region9: #{graphsage_forward.5} parent=0 // pred_fallthru
    _
  // Predicated region
  $region10: #{graphsage_forward.5} parent=0 // pred_check
    _
  $region11: #{graphsage_forward.5} parent=0 // pred_check_branch
    %32 = sbr.rel (0) target = $region13
  $region12: #{graphsage_forward.5} parent=0 // pred_region
    _
  $region13: #{graphsage_forward.5} parent=0 // pred_fallthru
    _
  // Predicated region
  $region14: #{graphsage_forward.5} parent=0 // pred_check
    _
  $region15: #{graphsage_forward.5} parent=0 // pred_check_branch
    %34 = sbr.rel (0) target = $region17
  $region16: #{graphsage_forward.5} parent=0 // pred_region
    _
  $region17: #{graphsage_forward.5} parent=0 // pred_fallthru
    _
  // Predicated region
  $region18: #{graphsage_forward.5} parent=0 // pred_check
    _
  $region19: #{graphsage_forward.5} parent=0 // pred_check_branch
    %36 = sbr.rel (0) target = $region21
  $region20: #{graphsage_forward.5} parent=0 // pred_region
    _
  $region21: #{graphsage_forward.5} parent=0 // pred_fallthru
    _
  // Predicated region
  $region22: #{graphsage_forward.5} parent=0 // pred_check
    _
  $region23: #{graphsage_forward.5} parent=0 // pred_check_branch
    %38 = sbr.rel (0) target = $region25
  $region24: #{graphsage_forward.5} parent=0 // pred_region
    _
  $region25: #{graphsage_forward.5} parent=0 // pred_fallthru
    _
  %s39 = sadd.s32 0, 0
  %s40 = smul.u32 %s39, 128
  %s41 = sadd.s32 %s40, 0
  %s42 = sld [smem:[#allocation4 + %s41]]
  %p43 = scmp.lt.s32.totalorder %s42, 0
  %s44 = scalar_select %p43, %s42, 0
  %s45 = smul.addr %s44, 4
  %s46 = scalar_lea.vmem %s2, %s45
  %s47 = sadd.s32 0, 0
  %s48 = smul.u32 %s47, 128
  %s49 = sadd.s32 %s48, 0
  %s50 = sld [smem:[#allocation4 + %s49]]
  %p51 = scmp.lt.s32.totalorder %s50, 0
  %s52 = scalar_select %p51, %s50, 0
  %s53 = smul.addr %s52, 4
  %s54 = scalar_lea.vmem %s2, %s53
  %s55 = sadd.s32 0, 0
  %s56 = smul.u32 %s55, 128
  %s57 = sadd.s32 %s56, 0
  %s58 = sld [smem:[#allocation4 + %s57]]
  %p60 = scmp.eq.s32.totalorder 0, 0
  // Predicated region
  $region26: #{graphsage_forward.5} parent=0 // pred_check
    %p61 = pneg %p60
  $region27: #{graphsage_forward.5} parent=0 // pred_check_branch
    %63 = sbr.rel (%p61) target = $region29
  $region28: #{graphsage_forward.5} parent=0 // pred_region
    %64 = vst [vmem:[#allocation2] sm:$0xff] 0.0
    %65 = vst [vmem:[#allocation2 + $0x8] sm:$0xff] 0.0
    %66 = vst [vmem:[#allocation2 + $0x10] sm:$0xff] 0.0
    %67 = vst [vmem:[#allocation2 + $0x18] sm:$0xff] 0.0
    %68 = vst [vmem:[#allocation2 + $0x20] sm:$0xff] 0.0
    %69 = vst [vmem:[#allocation2 + $0x28] sm:$0xff] 0.0
    %70 = vst [vmem:[#allocation2 + $0x30] sm:$0xff] 0.0
    %71 = vst [vmem:[#allocation2 + $0x38] sm:$0xff] 0.0
    %72 = vst [vmem:[#allocation2 + $0x40] sm:$0xff] 0.0
    %73 = vst [vmem:[#allocation2 + $0x48] sm:$0xff] 0.0
    %74 = vst [vmem:[#allocation2 + $0x50] sm:$0xff] 0.0
    %75 = vst [vmem:[#allocation2 + $0x58] sm:$0xff] 0.0
    %76 = vst [vmem:[#allocation2 + $0x60] sm:$0xff] 0.0
    %77 = vst [vmem:[#allocation2 + $0x68] sm:$0xff] 0.0
    %78 = vst [vmem:[#allocation2 + $0x70] sm:$0xff] 0.0
    %79 = vst [vmem:[#allocation2 + $0x78] sm:$0xff] 0.0
  $region29: #{graphsage_forward.5} parent=0 // pred_fallthru
    _
  %s80 = sld [smem:[#allocation5]]
  %p81 = scmp.lt.s32.totalorder 0, %s80
  // Predicated region
  $region30: #{graphsage_forward.5} parent=0 // pred_check
    %p82 = pneg %p81
  $region31: #{graphsage_forward.5} parent=0 // pred_check_branch
    %84 = sbr.rel (%p82) target = $region33
  $region32: #{graphsage_forward.5} parent=0 // pred_region
    %s85 = sadd.s32 0, 0
    %s86 = smul.u32 %s85, 128
    %s87 = sadd.s32 %s86, 0
    %s88 = sld [smem:[#allocation4 + %s87]]
    %s89 = smul.u32 %s88, 128
    %s90 = sshra.s32 %s89, 3
    %s91 = sand.u32 %s89, 7
    %s92 = smul.addr %s90, 4
    %s93 = scalar_lea.vmem %s3, %s92
    %v94 = vld [vmem:[%s93] sm:$0xf]
    %v95 = vld [vmem:[%s93 + $0x4] sm:$0xf]
    %v96 = vld [vmem:[%s93 + $0x8] sm:$0xf]
    %v97 = vld [vmem:[%s93 + $0xc] sm:$0xf]
    %v98 = vld [vmem:[%s93 + $0x10] sm:$0xf]
    %v99 = vld [vmem:[%s93 + $0x14] sm:$0xf]
    %v100 = vld [vmem:[%s93 + $0x18] sm:$0xf]
    %v101 = vld [vmem:[%s93 + $0x1c] sm:$0xf]
    %v102 = vld [vmem:[%s93 + $0x20] sm:$0xf]
    %v103 = vld [vmem:[%s93 + $0x24] sm:$0xf]
    %v104 = vld [vmem:[%s93 + $0x28] sm:$0xf]
    %v105 = vld [vmem:[%s93 + $0x2c] sm:$0xf]
    %v106 = vld [vmem:[%s93 + $0x30] sm:$0xf]
    %v107 = vld [vmem:[%s93 + $0x34] sm:$0xf]
    %v108 = vld [vmem:[%s93 + $0x38] sm:$0xf]
    %v109 = vld [vmem:[%s93 + $0x3c] sm:$0xf]
    %v110 = vld [vmem:[#allocation2] sm:$0xff]
    %v111 = vld [vmem:[#allocation2 + $0x8] sm:$0xff]
    %v112 = vld [vmem:[#allocation2 + $0x10] sm:$0xff]
    %v113 = vld [vmem:[#allocation2 + $0x18] sm:$0xff]
    %v114 = vld [vmem:[#allocation2 + $0x20] sm:$0xff]
    %v115 = vld [vmem:[#allocation2 + $0x28] sm:$0xff]
    %v116 = vld [vmem:[#allocation2 + $0x30] sm:$0xff]
    %v117 = vld [vmem:[#allocation2 + $0x38] sm:$0xff]
    %v118 = vld [vmem:[#allocation2 + $0x40] sm:$0xff]
    %v119 = vld [vmem:[#allocation2 + $0x48] sm:$0xff]
    %v120 = vld [vmem:[#allocation2 + $0x50] sm:$0xff]
    %v121 = vld [vmem:[#allocation2 + $0x58] sm:$0xff]
    %v122 = vld [vmem:[#allocation2 + $0x60] sm:$0xff]
    %v123 = vld [vmem:[#allocation2 + $0x68] sm:$0xff]
    %v124 = vld [vmem:[#allocation2 + $0x70] sm:$0xff]
    %v125 = vld [vmem:[#allocation2 + $0x78] sm:$0xff]
    %v126 = vld [vmem:[%s54] sm:$0xf]
    %v127 = vld [vmem:[%s54 + $0x4] sm:$0xf]
    %v128 = vld [vmem:[%s54 + $0x8] sm:$0xf]
    %v129 = vld [vmem:[%s54 + $0xc] sm:$0xf]
    %v130 = vld [vmem:[%s54 + $0x10] sm:$0xf]
    %v131 = vld [vmem:[%s54 + $0x14] sm:$0xf]
    %v132 = vld [vmem:[%s54 + $0x18] sm:$0xf]
    %v133 = vld [vmem:[%s54 + $0x1c] sm:$0xf]
    %v134 = vld [vmem:[%s54 + $0x20] sm:$0xf]
    %v135 = vld [vmem:[%s54 + $0x24] sm:$0xf]
    %v136 = vld [vmem:[%s54 + $0x28] sm:$0xf]
    %v137 = vld [vmem:[%s54 + $0x2c] sm:$0xf]
    %v138 = vld [vmem:[%s54 + $0x30] sm:$0xf]
    %v139 = vld [vmem:[%s54 + $0x34] sm:$0xf]
    %v140 = vld [vmem:[%s54 + $0x38] sm:$0xf]
    %v141 = vld [vmem:[%s54 + $0x3c] sm:$0xf]
    %v158 = vunpack.c.l.b16 %v126
    %v159 = vunpack.c.l.b16 %v127
    %v160 = vunpack.c.l.b16 %v128
    %v161 = vunpack.c.l.b16 %v129
    %v162 = vunpack.c.l.b16 %v130
    %v163 = vunpack.c.l.b16 %v131
    %v164 = vunpack.c.l.b16 %v132
    %v165 = vunpack.c.l.b16 %v133
    %v166 = vunpack.c.l.b16 %v134
    %v167 = vunpack.c.l.b16 %v135
    %v168 = vunpack.c.l.b16 %v136
    %v169 = vunpack.c.l.b16 %v137
    %v170 = vunpack.c.l.b16 %v138
    %v171 = vunpack.c.l.b16 %v139
    %v172 = vunpack.c.l.b16 %v140
    %v173 = vunpack.c.l.b16 %v141
    %v174 = vpack.c.b16 %v159, %v158
    %v175 = vpack.c.b16 %v161, %v160
    %v176 = vpack.c.b16 %v163, %v162
    %v177 = vpack.c.b16 %v165, %v164
    %v178 = vpack.c.b16 %v167, %v166
    %v179 = vpack.c.b16 %v169, %v168
    %v180 = vpack.c.b16 %v171, %v170
    %v181 = vpack.c.b16 %v173, %v172
    %v206 = vunpack.c.l.b16 %v94
    %v207 = vunpack.c.l.b16 %v95
    %v208 = vunpack.c.l.b16 %v96
    %v209 = vunpack.c.l.b16 %v97
    %v210 = vunpack.c.l.b16 %v98
    %v211 = vunpack.c.l.b16 %v99
    %v212 = vunpack.c.l.b16 %v100
    %v213 = vunpack.c.l.b16 %v101
    %v214 = vunpack.c.l.b16 %v102
    %v215 = vunpack.c.l.b16 %v103
    %v216 = vunpack.c.l.b16 %v104
    %v217 = vunpack.c.l.b16 %v105
    %v218 = vunpack.c.l.b16 %v106
    %v219 = vunpack.c.l.b16 %v107
    %v220 = vunpack.c.l.b16 %v108
    %v221 = vunpack.c.l.b16 %v109
    %v222 = vpack.c.b16 %v207, %v206
    %v223 = vpack.c.b16 %v209, %v208
    %v224 = vpack.c.b16 %v211, %v210
    %v225 = vpack.c.b16 %v213, %v212
    %v226 = vpack.c.b16 %v215, %v214
    %v227 = vpack.c.b16 %v217, %v216
    %v228 = vpack.c.b16 %v219, %v218
    %v229 = vpack.c.b16 %v221, %v220
    %238 = vmatprep.subr.bf16.mxu0 0
    %239 = vmatpush1.bf16.msra.mxu0 %v222
    %240 = vmatprep.subr.bf16.mxu0 0
    %241 = vmatpush1.bf16.msra.mxu0 %v223
    %242 = vmatprep.subr.bf16.mxu0 0
    %243 = vmatpush1.bf16.msra.mxu0 %v224
    %244 = vmatprep.subr.bf16.mxu0 0
    %245 = vmatpush1.bf16.msra.mxu0 %v225
    %246 = vmatprep.subr.bf16.mxu0 0
    %247 = vmatpush1.bf16.msra.mxu0 %v226
    %248 = vmatprep.subr.bf16.mxu0 0
    %249 = vmatpush1.bf16.msra.mxu0 %v227
    %250 = vmatprep.subr.bf16.mxu0 0
    %251 = vmatpush1.bf16.msra.mxu0 %v228
    %252 = vmatprep.subr.bf16.mxu0 0
    %253 = vmatpush1.bf16.msra.mxu0 %v229
    %254 = vmatprep.subr.bf16.mxu0 0
    %255 = vmatpush1.bf16.msra.mxu0 0
    %256 = vmatprep.subr.bf16.mxu0 0
    %257 = vmatpush1.bf16.msra.mxu0 0
    %258 = vmatprep.subr.bf16.mxu0 0
    %259 = vmatpush1.bf16.msra.mxu0 0
    %260 = vmatprep.subr.bf16.mxu0 0
    %261 = vmatpush1.bf16.msra.mxu0 0
    %262 = vmatprep.subr.bf16.mxu0 0
    %263 = vmatpush1.bf16.msra.mxu0 0
    %264 = vmatprep.subr.bf16.mxu0 0
    %265 = vmatpush1.bf16.msra.mxu0 0
    %266 = vmatprep.subr.bf16.mxu0 0
    %267 = vmatpush1.bf16.msra.mxu0 0
    %268 = vmatprep.subr.bf16.mxu0 0
    %269 = vmatpush1.bf16.msra.mxu0 0
    %270 = vmatprep.mubr.bf16.mxu0 0
    %271 = vmatmul.mubr.bf16.gmra.mrb[0].mxu0 %v174
    %v272 = vpop.f32.mrb[0].mxu0
    %v273 = vadd.f32 0.0, %v272
    %v274 = vpop.f32.mrb[0].mxu0
    %v275 = vpop.f32.mrb[0].mxu0
    %v276 = vadd.f32 0.0, %v275
    %v277 = vpop.f32.mrb[0].mxu0
    %278 = vmatprep.mubr.bf16.mxu0 0
    %279 = vmatmul.mubr.bf16.gmra.mrb[0].mxu0 %v175
    %v280 = vpop.f32.mrb[0].mxu0
    %v281 = vadd.f32 0.0, %v280
    %v282 = vpop.f32.mrb[0].mxu0
    %v283 = vpop.f32.mrb[0].mxu0
    %v284 = vadd.f32 0.0, %v283
    %v285 = vpop.f32.mrb[0].mxu0
    %286 = vmatprep.mubr.bf16.mxu0 0
    %287 = vmatmul.mubr.bf16.gmra.mrb[0].mxu0 %v176
    %v288 = vpop.f32.mrb[0].mxu0
    %v289 = vadd.f32 0.0, %v288
    %v290 = vpop.f32.mrb[0].mxu0
    %v291 = vpop.f32.mrb[0].mxu0
    %v292 = vadd.f32 0.0, %v291
    %v293 = vpop.f32.mrb[0].mxu0
    %294 = vmatprep.mubr.bf16.mxu0 0
    %295 = vmatmul.mubr.bf16.gmra.mrb[0].mxu0 %v177
    %v296 = vpop.f32.mrb[0].mxu0
    %v297 = vadd.f32 0.0, %v296
    %v298 = vpop.f32.mrb[0].mxu0
    %v299 = vpop.f32.mrb[0].mxu0
    %v300 = vadd.f32 0.0, %v299
    %v301 = vpop.f32.mrb[0].mxu0
    %302 = vmatprep.mubr.bf16.mxu0 0
    %303 = vmatmul.mubr.bf16.gmra.mrb[0].mxu0 %v178
    %v304 = vpop.f32.mrb[0].mxu0
    %v305 = vadd.f32 0.0, %v304
    %v306 = vpop.f32.mrb[0].mxu0
    %v307 = vpop.f32.mrb[0].mxu0
    %v308 = vadd.f32 0.0, %v307
    %v309 = vpop.f32.mrb[0].mxu0
    %310 = vmatprep.mubr.bf16.mxu0 0
    %311 = vmatmul.mubr.bf16.gmra.mrb[0].mxu0 %v179
    %v312 = vpop.f32.mrb[0].mxu0
    %v313 = vadd.f32 0.0, %v312
    %v314 = vpop.f32.mrb[0].mxu0
    %v315 = vpop.f32.mrb[0].mxu0
    %v316 = vadd.f32 0.0, %v315
    %v317 = vpop.f32.mrb[0].mxu0
    %318 = vmatprep.mubr.bf16.mxu0 0
    %319 = vmatmul.mubr.bf16.gmra.mrb[0].mxu0 %v180
    %v320 = vpop.f32.mrb[0].mxu0
    %v321 = vadd.f32 0.0, %v320
    %v322 = vpop.f32.mrb[0].mxu0
    %v323 = vpop.f32.mrb[0].mxu0
    %v324 = vadd.f32 0.0, %v323
    %v325 = vpop.f32.mrb[0].mxu0
    %326 = vmatprep.mubr.bf16.mxu0 0
    %327 = vmatmul.mubr.bf16.gmra.mrb[0].mxu0 %v181
    %v328 = vpop.f32.mrb[0].mxu0
    %v329 = vadd.f32 0.0, %v328
    %v330 = vpop.f32.mrb[0].mxu0
    %v331 = vpop.f32.mrb[0].mxu0
    %v332 = vadd.f32 0.0, %v331
    %v333 = vpop.f32.mrb[0].mxu0
    %334 = vdwg.mxu0
    %v335 = vadd.f32 %v110, %v273
    %v336 = vadd.f32 %v111, %v276
    %v337 = vadd.f32 %v112, %v281
    %v338 = vadd.f32 %v113, %v284
    %v339 = vadd.f32 %v114, %v289
    %v340 = vadd.f32 %v115, %v292
    %v341 = vadd.f32 %v116, %v297
    %v342 = vadd.f32 %v117, %v300
    %v343 = vadd.f32 %v118, %v305
    %v344 = vadd.f32 %v119, %v308
    %v345 = vadd.f32 %v120, %v313
    %v346 = vadd.f32 %v121, %v316
    %v347 = vadd.f32 %v122, %v321
    %v348 = vadd.f32 %v123, %v324
    %v349 = vadd.f32 %v124, %v329
    %v350 = vadd.f32 %v125, %v332
    %351 = vst [vmem:[#allocation2] sm:$0xff] %v335
    %352 = vst [vmem:[#allocation2 + $0x8] sm:$0xff] %v336
    %353 = vst [vmem:[#allocation2 + $0x10] sm:$0xff] %v337
    %354 = vst [vmem:[#allocation2 + $0x18] sm:$0xff] %v338
    %355 = vst [vmem:[#allocation2 + $0x20] sm:$0xff] %v339
    %356 = vst [vmem:[#allocation2 + $0x28] sm:$0xff] %v340
    %357 = vst [vmem:[#allocation2 + $0x30] sm:$0xff] %v341
    %358 = vst [vmem:[#allocation2 + $0x38] sm:$0xff] %v342
    %359 = vst [vmem:[#allocation2 + $0x40] sm:$0xff] %v343
    %360 = vst [vmem:[#allocation2 + $0x48] sm:$0xff] %v344
    %361 = vst [vmem:[#allocation2 + $0x50] sm:$0xff] %v345
    %362 = vst [vmem:[#allocation2 + $0x58] sm:$0xff] %v346
    %363 = vst [vmem:[#allocation2 + $0x60] sm:$0xff] %v347
    %364 = vst [vmem:[#allocation2 + $0x68] sm:$0xff] %v348
    %365 = vst [vmem:[#allocation2 + $0x70] sm:$0xff] %v349
    %366 = vst [vmem:[#allocation2 + $0x78] sm:$0xff] %v350
  $region33: #{graphsage_forward.5} parent=0 // pred_fallthru
    _
  // Predicated region
  $region34: #{graphsage_forward.5} parent=0 // pred_check
    %p367 = pneg %p60
  $region35: #{graphsage_forward.5} parent=0 // pred_check_branch
    %369 = sbr.rel (%p367) target = $region37
  $region36: #{graphsage_forward.5} parent=0 // pred_region
    %v370 = vld [vmem:[%s4] sm:$0xf]
    %v371 = vld [vmem:[%s4 + $0x4] sm:$0xf]
    %v372 = vld [vmem:[%s4 + $0x8] sm:$0xf]
    %v373 = vld [vmem:[%s4 + $0xc] sm:$0xf]
    %v374 = vld [vmem:[%s4 + $0x10] sm:$0xf]
    %v375 = vld [vmem:[%s4 + $0x14] sm:$0xf]
    %v376 = vld [vmem:[%s4 + $0x18] sm:$0xf]
    %v377 = vld [vmem:[%s4 + $0x1c] sm:$0xf]
    %v378 = vld [vmem:[%s4 + $0x20] sm:$0xf]
    %v379 = vld [vmem:[%s4 + $0x24] sm:$0xf]
    %v380 = vld [vmem:[%s4 + $0x28] sm:$0xf]
    %v381 = vld [vmem:[%s4 + $0x2c] sm:$0xf]
    %v382 = vld [vmem:[%s4 + $0x30] sm:$0xf]
    %v383 = vld [vmem:[%s4 + $0x34] sm:$0xf]
    %v384 = vld [vmem:[%s4 + $0x38] sm:$0xf]
    %v385 = vld [vmem:[%s4 + $0x3c] sm:$0xf]
    %v386 = vld [vmem:[%s5] sm:$0xf]
    %v387 = vld [vmem:[%s5 + $0x4] sm:$0xf]
    %v388 = vld [vmem:[%s5 + $0x8] sm:$0xf]
    %v389 = vld [vmem:[%s5 + $0xc] sm:$0xf]
    %v390 = vld [vmem:[%s5 + $0x10] sm:$0xf]
    %v391 = vld [vmem:[%s5 + $0x14] sm:$0xf]
    %v392 = vld [vmem:[%s5 + $0x18] sm:$0xf]
    %v393 = vld [vmem:[%s5 + $0x1c] sm:$0xf]
    %v394 = vld [vmem:[%s5 + $0x20] sm:$0xf]
    %v395 = vld [vmem:[%s5 + $0x24] sm:$0xf]
    %v396 = vld [vmem:[%s5 + $0x28] sm:$0xf]
    %v397 = vld [vmem:[%s5 + $0x2c] sm:$0xf]
    %v398 = vld [vmem:[%s5 + $0x30] sm:$0xf]
    %v399 = vld [vmem:[%s5 + $0x34] sm:$0xf]
    %v400 = vld [vmem:[%s5 + $0x38] sm:$0xf]
    %v401 = vld [vmem:[%s5 + $0x3c] sm:$0xf]
    %v402 = vld [vmem:[%s6] sm:$0x1]
    %v404 = vlaneseq
    %v405 = vshrl.u32 %v404, 7
    %v406 = vsub.s32 0, %v405
    %v407 = vrot.slane %v402, %v406
    %v425 = vunpack.c.l.b16 %v370
    %v426 = vunpack.c.l.b16 %v371
    %v427 = vunpack.c.l.b16 %v372
    %v428 = vunpack.c.l.b16 %v373
    %v429 = vunpack.c.l.b16 %v374
    %v430 = vunpack.c.l.b16 %v375
    %v431 = vunpack.c.l.b16 %v376
    %v432 = vunpack.c.l.b16 %v377
    %v433 = vunpack.c.l.b16 %v378
    %v434 = vunpack.c.l.b16 %v379
    %v435 = vunpack.c.l.b16 %v380
    %v436 = vunpack.c.l.b16 %v381
    %v437 = vunpack.c.l.b16 %v382
    %v438 = vunpack.c.l.b16 %v383
    %v439 = vunpack.c.l.b16 %v384
    %v440 = vunpack.c.l.b16 %v385
    %v441 = vpack.c.b16 %v426, %v425
    %v442 = vpack.c.b16 %v428, %v427
    %v443 = vpack.c.b16 %v430, %v429
    %v444 = vpack.c.b16 %v432, %v431
    %v445 = vpack.c.b16 %v434, %v433
    %v446 = vpack.c.b16 %v436, %v435
    %v447 = vpack.c.b16 %v438, %v437
    %v448 = vpack.c.b16 %v440, %v439
    %v473 = vunpack.c.l.b16 %v386
    %v474 = vunpack.c.l.b16 %v387
    %v475 = vunpack.c.l.b16 %v388
    %v476 = vunpack.c.l.b16 %v389
    %v477 = vunpack.c.l.b16 %v390
    %v478 = vunpack.c.l.b16 %v391
    %v479 = vunpack.c.l.b16 %v392
    %v480 = vunpack.c.l.b16 %v393
    %v481 = vunpack.c.l.b16 %v394
    %v482 = vunpack.c.l.b16 %v395
    %v483 = vunpack.c.l.b16 %v396
    %v484 = vunpack.c.l.b16 %v397
    %v485 = vunpack.c.l.b16 %v398
    %v486 = vunpack.c.l.b16 %v399
    %v487 = vunpack.c.l.b16 %v400
    %v488 = vunpack.c.l.b16 %v401
    %v489 = vpack.c.b16 %v474, %v473
    %v490 = vpack.c.b16 %v476, %v475
    %v491 = vpack.c.b16 %v478, %v477
    %v492 = vpack.c.b16 %v480, %v479
    %v493 = vpack.c.b16 %v482, %v481
    %v494 = vpack.c.b16 %v484, %v483
    %v495 = vpack.c.b16 %v486, %v485
    %v496 = vpack.c.b16 %v488, %v487
    %505 = vmatprep.subr.bf16.mxu0 0
    %506 = vmatpush1.bf16.msra.mxu0 %v489
    %507 = vmatprep.subr.bf16.mxu0 0
    %508 = vmatpush1.bf16.msra.mxu0 %v490
    %509 = vmatprep.subr.bf16.mxu0 0
    %510 = vmatpush1.bf16.msra.mxu0 %v491
    %511 = vmatprep.subr.bf16.mxu0 0
    %512 = vmatpush1.bf16.msra.mxu0 %v492
    %513 = vmatprep.subr.bf16.mxu0 0
    %514 = vmatpush1.bf16.msra.mxu0 %v493
    %515 = vmatprep.subr.bf16.mxu0 0
    %516 = vmatpush1.bf16.msra.mxu0 %v494
    %517 = vmatprep.subr.bf16.mxu0 0
    %518 = vmatpush1.bf16.msra.mxu0 %v495
    %519 = vmatprep.subr.bf16.mxu0 0
    %520 = vmatpush1.bf16.msra.mxu0 %v496
    %521 = vmatprep.subr.bf16.mxu0 0
    %522 = vmatpush1.bf16.msra.mxu0 0
    %523 = vmatprep.subr.bf16.mxu0 0
    %524 = vmatpush1.bf16.msra.mxu0 0
    %525 = vmatprep.subr.bf16.mxu0 0
    %526 = vmatpush1.bf16.msra.mxu0 0
    %527 = vmatprep.subr.bf16.mxu0 0
    %528 = vmatpush1.bf16.msra.mxu0 0
    %529 = vmatprep.subr.bf16.mxu0 0
    %530 = vmatpush1.bf16.msra.mxu0 0
    %531 = vmatprep.subr.bf16.mxu0 0
    %532 = vmatpush1.bf16.msra.mxu0 0
    %533 = vmatprep.subr.bf16.mxu0 0
    %534 = vmatpush1.bf16.msra.mxu0 0
    %535 = vmatprep.subr.bf16.mxu0 0
    %536 = vmatpush1.bf16.msra.mxu0 0
    %537 = vmatprep.mubr.bf16.mxu0 0
    %538 = vmatmul.mubr.bf16.gmra.mrb[0].mxu0 %v441
    %v539 = vpop.f32.mrb[0].mxu0
    %v540 = vadd.f32 %v407, %v539
    %v541 = vpop.f32.mrb[0].mxu0
    %v542 = vpop.f32.mrb[0].mxu0
    %v543 = vadd.f32 %v407, %v542
    %v544 = vpop.f32.mrb[0].mxu0
    %545 = vmatprep.mubr.bf16.mxu0 0
    %546 = vmatmul.mubr.bf16.gmra.mrb[0].mxu0 %v442
    %v547 = vpop.f32.mrb[0].mxu0
    %v548 = vadd.f32 %v407, %v547
    %v549 = vpop.f32.mrb[0].mxu0
    %v550 = vpop.f32.mrb[0].mxu0
    %v551 = vadd.f32 %v407, %v550
    %v552 = vpop.f32.mrb[0].mxu0
    %553 = vmatprep.mubr.bf16.mxu0 0
    %554 = vmatmul.mubr.bf16.gmra.mrb[0].mxu0 %v443
    %v555 = vpop.f32.mrb[0].mxu0
    %v556 = vadd.f32 %v407, %v555
    %v557 = vpop.f32.mrb[0].mxu0
    %v558 = vpop.f32.mrb[0].mxu0
    %v559 = vadd.f32 %v407, %v558
    %v560 = vpop.f32.mrb[0].mxu0
    %561 = vmatprep.mubr.bf16.mxu0 0
    %562 = vmatmul.mubr.bf16.gmra.mrb[0].mxu0 %v444
    %v563 = vpop.f32.mrb[0].mxu0
    %v564 = vadd.f32 %v407, %v563
    %v565 = vpop.f32.mrb[0].mxu0
    %v566 = vpop.f32.mrb[0].mxu0
    %v567 = vadd.f32 %v407, %v566
    %v568 = vpop.f32.mrb[0].mxu0
    %569 = vmatprep.mubr.bf16.mxu0 0
    %570 = vmatmul.mubr.bf16.gmra.mrb[0].mxu0 %v445
    %v571 = vpop.f32.mrb[0].mxu0
    %v572 = vadd.f32 %v407, %v571
    %v573 = vpop.f32.mrb[0].mxu0
    %v574 = vpop.f32.mrb[0].mxu0
    %v575 = vadd.f32 %v407, %v574
    %v576 = vpop.f32.mrb[0].mxu0
    %577 = vmatprep.mubr.bf16.mxu0 0
    %578 = vmatmul.mubr.bf16.gmra.mrb[0].mxu0 %v446
    %v579 = vpop.f32.mrb[0].mxu0
    %v580 = vadd.f32 %v407, %v579
    %v581 = vpop.f32.mrb[0].mxu0
    %v582 = vpop.f32.mrb[0].mxu0
    %v583 = vadd.f32 %v407, %v582
    %v584 = vpop.f32.mrb[0].mxu0
    %585 = vmatprep.mubr.bf16.mxu0 0
    %586 = vmatmul.mubr.bf16.gmra.mrb[0].mxu0 %v447
    %v587 = vpop.f32.mrb[0].mxu0
    %v588 = vadd.f32 %v407, %v587
    %v589 = vpop.f32.mrb[0].mxu0
    %v590 = vpop.f32.mrb[0].mxu0
    %v591 = vadd.f32 %v407, %v590
    %v592 = vpop.f32.mrb[0].mxu0
    %593 = vmatprep.mubr.bf16.mxu0 0
    %594 = vmatmul.mubr.bf16.gmra.mrb[0].mxu0 %v448
    %v595 = vpop.f32.mrb[0].mxu0
    %v596 = vadd.f32 %v407, %v595
    %v597 = vpop.f32.mrb[0].mxu0
    %v598 = vpop.f32.mrb[0].mxu0
    %v599 = vadd.f32 %v407, %v598
    %v600 = vpop.f32.mrb[0].mxu0
    %601 = vdwg.mxu0
    %v602 = vld [vmem:[#allocation2] sm:$0xff]
    %v603 = vld [vmem:[#allocation2 + $0x8] sm:$0xff]
    %v604 = vld [vmem:[#allocation2 + $0x10] sm:$0xff]
    %v605 = vld [vmem:[#allocation2 + $0x18] sm:$0xff]
    %v606 = vld [vmem:[#allocation2 + $0x20] sm:$0xff]
    %v607 = vld [vmem:[#allocation2 + $0x28] sm:$0xff]
    %v608 = vld [vmem:[#allocation2 + $0x30] sm:$0xff]
    %v609 = vld [vmem:[#allocation2 + $0x38] sm:$0xff]
    %v610 = vld [vmem:[#allocation2 + $0x40] sm:$0xff]
    %v611 = vld [vmem:[#allocation2 + $0x48] sm:$0xff]
    %v612 = vld [vmem:[#allocation2 + $0x50] sm:$0xff]
    %v613 = vld [vmem:[#allocation2 + $0x58] sm:$0xff]
    %v614 = vld [vmem:[#allocation2 + $0x60] sm:$0xff]
    %v615 = vld [vmem:[#allocation2 + $0x68] sm:$0xff]
    %v616 = vld [vmem:[#allocation2 + $0x70] sm:$0xff]
    %v617 = vld [vmem:[#allocation2 + $0x78] sm:$0xff]
    %v618 = vld [vmem:[%s7] sm:$0xff]
    %v619 = vld [vmem:[%s7 + $0x8] sm:$0xff]
    %v620 = vld [vmem:[%s7 + $0x10] sm:$0xff]
    %v621 = vld [vmem:[%s7 + $0x18] sm:$0xff]
    %v622 = vld [vmem:[%s7 + $0x20] sm:$0xff]
    %v623 = vld [vmem:[%s7 + $0x28] sm:$0xff]
    %v624 = vld [vmem:[%s7 + $0x30] sm:$0xff]
    %v625 = vld [vmem:[%s7 + $0x38] sm:$0xff]
    %v626 = vld [vmem:[%s7 + $0x40] sm:$0xff]
    %v627 = vld [vmem:[%s7 + $0x48] sm:$0xff]
    %v628 = vld [vmem:[%s7 + $0x50] sm:$0xff]
    %v629 = vld [vmem:[%s7 + $0x58] sm:$0xff]
    %v630 = vld [vmem:[%s7 + $0x60] sm:$0xff]
    %v631 = vld [vmem:[%s7 + $0x68] sm:$0xff]
    %v632 = vld [vmem:[%s7 + $0x70] sm:$0xff]
    %v633 = vld [vmem:[%s7 + $0x78] sm:$0xff]
    %635 = vset.pattern.permute.xlu0 0
    %636 = vperm.xlu0 %635, %v618
    %v637 = vpop.permute.xlu0 %636
    %640 = vset.pattern.permute.xlu0 0
    %641 = vperm.xlu0 %640, %v619
    %v642 = vpop.permute.xlu0 %641
    %645 = vset.pattern.permute.xlu0 0
    %646 = vperm.xlu0 %645, %v620
    %v647 = vpop.permute.xlu0 %646
    %650 = vset.pattern.permute.xlu0 0
    %651 = vperm.xlu0 %650, %v621
    %v652 = vpop.permute.xlu0 %651
    %655 = vset.pattern.permute.xlu0 0
    %656 = vperm.xlu0 %655, %v622
    %v657 = vpop.permute.xlu0 %656
    %660 = vset.pattern.permute.xlu0 0
    %661 = vperm.xlu0 %660, %v623
    %v662 = vpop.permute.xlu0 %661
    %665 = vset.pattern.permute.xlu0 0
    %666 = vperm.xlu0 %665, %v624
    %v667 = vpop.permute.xlu0 %666
    %670 = vset.pattern.permute.xlu0 0
    %671 = vperm.xlu0 %670, %v625
    %v672 = vpop.permute.xlu0 %671
    %675 = vset.pattern.permute.xlu0 0
    %676 = vperm.xlu0 %675, %v626
    %v677 = vpop.permute.xlu0 %676
    %680 = vset.pattern.permute.xlu0 0
    %681 = vperm.xlu0 %680, %v627
    %v682 = vpop.permute.xlu0 %681
    %685 = vset.pattern.permute.xlu0 0
    %686 = vperm.xlu0 %685, %v628
    %v687 = vpop.permute.xlu0 %686
    %690 = vset.pattern.permute.xlu0 0
    %691 = vperm.xlu0 %690, %v629
    %v692 = vpop.permute.xlu0 %691
    %695 = vset.pattern.permute.xlu0 0
    %696 = vperm.xlu0 %695, %v630
    %v697 = vpop.permute.xlu0 %696
    %700 = vset.pattern.permute.xlu0 0
    %701 = vperm.xlu0 %700, %v631
    %v702 = vpop.permute.xlu0 %701
    %705 = vset.pattern.permute.xlu0 0
    %706 = vperm.xlu0 %705, %v632
    %v707 = vpop.permute.xlu0 %706
    %710 = vset.pattern.permute.xlu0 0
    %711 = vperm.xlu0 %710, %v633
    %v712 = vpop.permute.xlu0 %711
    %v714 = vmul.f32 %v602, %v637
    %v715 = vmul.f32 %v603, %v642
    %v716 = vmul.f32 %v604, %v647
    %v717 = vmul.f32 %v605, %v652
    %v718 = vmul.f32 %v606, %v657
    %v719 = vmul.f32 %v607, %v662
    %v720 = vmul.f32 %v608, %v667
    %v721 = vmul.f32 %v609, %v672
    %v722 = vmul.f32 %v610, %v677
    %v723 = vmul.f32 %v611, %v682
    %v724 = vmul.f32 %v612, %v687
    %v725 = vmul.f32 %v613, %v692
    %v726 = vmul.f32 %v614, %v697
    %v727 = vmul.f32 %v615, %v702
    %v728 = vmul.f32 %v616, %v707
    %v729 = vmul.f32 %v617, %v712
    %v730 = vadd.f32 %v714, %v540
    %v731 = vadd.f32 %v715, %v543
    %v732 = vadd.f32 %v716, %v548
    %v733 = vadd.f32 %v717, %v551
    %v734 = vadd.f32 %v718, %v556
    %v735 = vadd.f32 %v719, %v559
    %v736 = vadd.f32 %v720, %v564
    %v737 = vadd.f32 %v721, %v567
    %v738 = vadd.f32 %v722, %v572
    %v739 = vadd.f32 %v723, %v575
    %v740 = vadd.f32 %v724, %v580
    %v741 = vadd.f32 %v725, %v583
    %v742 = vadd.f32 %v726, %v588
    %v743 = vadd.f32 %v727, %v591
    %v744 = vadd.f32 %v728, %v596
    %v745 = vadd.f32 %v729, %v599
    %v746 = vmax.f32 %v730, 0.0
    %v747 = vmax.f32 %v731, 0.0
    %v748 = vmax.f32 %v732, 0.0
    %v749 = vmax.f32 %v733, 0.0
    %v750 = vmax.f32 %v734, 0.0
    %v751 = vmax.f32 %v735, 0.0
    %v752 = vmax.f32 %v736, 0.0
    %v753 = vmax.f32 %v737, 0.0
    %v754 = vmax.f32 %v738, 0.0
    %v755 = vmax.f32 %v739, 0.0
    %v756 = vmax.f32 %v740, 0.0
    %v757 = vmax.f32 %v741, 0.0
    %v758 = vmax.f32 %v742, 0.0
    %v759 = vmax.f32 %v743, 0.0
    %v760 = vmax.f32 %v744, 0.0
    %v761 = vmax.f32 %v745, 0.0
    %v762 = vpack.c.bf16 %v747, %v746
    %v763 = vpack.c.bf16 %v749, %v748
    %v764 = vpack.c.bf16 %v751, %v750
    %v765 = vpack.c.bf16 %v753, %v752
    %v766 = vpack.c.bf16 %v755, %v754
    %v767 = vpack.c.bf16 %v757, %v756
    %v768 = vpack.c.bf16 %v759, %v758
    %v769 = vpack.c.bf16 %v761, %v760
    %v778 = vunpack.c.l.b16 %v762
    %v779 = vunpack.c.h.b16 %v762
    %v780 = vunpack.c.l.b16 %v763
    %v781 = vunpack.c.h.b16 %v763
    %v782 = vunpack.c.l.b16 %v764
    %v783 = vunpack.c.h.b16 %v764
    %v784 = vunpack.c.l.b16 %v765
    %v785 = vunpack.c.h.b16 %v765
    %v786 = vunpack.c.l.b16 %v766
    %v787 = vunpack.c.h.b16 %v766
    %v788 = vunpack.c.l.b16 %v767
    %v789 = vunpack.c.h.b16 %v767
    %v790 = vunpack.c.l.b16 %v768
    %v791 = vunpack.c.h.b16 %v768
    %v792 = vunpack.c.l.b16 %v769
    %v793 = vunpack.c.h.b16 %v769
    %v794 = vpack.c.b16 %v778, %v778
    %v795 = vpack.c.b16 %v779, %v779
    %v796 = vpack.c.b16 %v780, %v780
    %v797 = vpack.c.b16 %v781, %v781
    %v798 = vpack.c.b16 %v782, %v782
    %v799 = vpack.c.b16 %v783, %v783
    %v800 = vpack.c.b16 %v784, %v784
    %v801 = vpack.c.b16 %v785, %v785
    %v802 = vpack.c.b16 %v786, %v786
    %v803 = vpack.c.b16 %v787, %v787
    %v804 = vpack.c.b16 %v788, %v788
    %v805 = vpack.c.b16 %v789, %v789
    %v806 = vpack.c.b16 %v790, %v790
    %v807 = vpack.c.b16 %v791, %v791
    %v808 = vpack.c.b16 %v792, %v792
    %v809 = vpack.c.b16 %v793, %v793
    %826 = vst [vmem:[%s8] sm:$0xf] %v794
    %827 = vst [vmem:[%s8 + $0x4] sm:$0xf] %v795
    %828 = vst [vmem:[%s8 + $0x8] sm:$0xf] %v796
    %829 = vst [vmem:[%s8 + $0xc] sm:$0xf] %v797
    %830 = vst [vmem:[%s8 + $0x10] sm:$0xf] %v798
    %831 = vst [vmem:[%s8 + $0x14] sm:$0xf] %v799
    %832 = vst [vmem:[%s8 + $0x18] sm:$0xf] %v800
    %833 = vst [vmem:[%s8 + $0x1c] sm:$0xf] %v801
    %834 = vst [vmem:[%s8 + $0x20] sm:$0xf] %v802
    %835 = vst [vmem:[%s8 + $0x24] sm:$0xf] %v803
    %836 = vst [vmem:[%s8 + $0x28] sm:$0xf] %v804
    %837 = vst [vmem:[%s8 + $0x2c] sm:$0xf] %v805
    %838 = vst [vmem:[%s8 + $0x30] sm:$0xf] %v806
    %839 = vst [vmem:[%s8 + $0x34] sm:$0xf] %v807
    %840 = vst [vmem:[%s8 + $0x38] sm:$0xf] %v808
    %841 = vst [vmem:[%s8 + $0x3c] sm:$0xf] %v809
  $region37: #{graphsage_forward.5} parent=0 // pred_fallthru
    _
  // Predicated region
  $region38: #{graphsage_forward.5} parent=0 // pred_check
    _
  $region39: #{graphsage_forward.5} parent=0 // pred_check_branch
    %843 = sbr.rel (0) target = $region41
  $region40: #{graphsage_forward.5} parent=0 // pred_region
    _
  $region41: #{graphsage_forward.5} parent=0 // pred_fallthru
    _
  // Predicated region
  $region42: #{graphsage_forward.5} parent=0 // pred_check
    _
  $region43: #{graphsage_forward.5} parent=0 // pred_check_branch
    %845 = sbr.rel (0) target = $region45
  $region44: #{graphsage_forward.5} parent=0 // pred_region
    _
  $region45: #{graphsage_forward.5} parent=0 // pred_fallthru
    _

</llo_original>
